<compile_context>
chip_gen: v6e
topology: v6e:2x2x1
jax: 0.10.0
libtpu: 0.0.40
codegen_flags: <defaults>
</compile_context>

<pallas_src>
import jax
import jax.numpy as jnp
from jax import lax
from jax.experimental import pallas as pl
from jax.experimental.pallas import tpu as pltpu


# ---------------------------------------------------------------------------
# Fused CustomCLIP forward kernel (single un-gridded invocation)
# ---------------------------------------------------------------------------
def custom_clip_kernel(
    img_ref,          # [Bp, C*H*W]  flattened image, rows padded to 8 (bf16)
    txt_ref,          # [N, Dt]      pooled text features (bf16)
    w_embed_ref,      # [C*H*W, Dv]  vision pooled-embed stand-in (bf16)
    wv_ref,           # [Dv, P]      visual_projection weight (bf16, no bias)
    wt_ref,           # [Dt, P]      text_projection weight   (bf16, no bias)
    w1_ref,           # [P, P//4]    adapter.fc[0] weight (bf16)
    b1_ref,           # [1, P//4]    adapter.fc[0] bias (f32)
    w2_ref,           # [P//4, P]    adapter.fc[2] weight (bf16)
    b2_ref,           # [1, P]       adapter.fc[2] bias (f32)
    scale_ref,        # [1, 1]       exp(logit_scale), SMEM scalar (f32)
    logits_img_ref,   # [Bp, N]  out (f32)
):
    f32 = jnp.float32
    bf16 = jnp.bfloat16

    # ----- image encoder stand-in: pooled visual features [Bp, Dv] ----------
    vis_pooled = jnp.dot(img_ref[...], w_embed_ref[...],
                         preferred_element_type=f32)

    # ----- visual_projection (Linear, bias=False) ----------------------------
    image_features = jnp.dot(vis_pooled.astype(bf16), wv_ref[...],
                             preferred_element_type=f32)            # [Bp, P] f32

    # ----- Adapter(512, 4): Linear -> ReLU -> Linear -> ReLU -----------------
    b1 = b1_ref[...]                       # hoisted bias loads (f32)
    b2 = b2_ref[...]
    h = jnp.dot(image_features.astype(bf16), w1_ref[...],
                preferred_element_type=f32) + b1
    h = jnp.maximum(h, 0.0)
    x = jnp.dot(h.astype(bf16), w2_ref[...],
                preferred_element_type=f32) + b2
    x = jnp.maximum(x, 0.0)

    # ----- residual blend: ratio * x + (1 - ratio) * image_features ----------
    ratio = 0.2
    image_features = ratio * x + (1.0 - ratio) * image_features

    # ----- text_projection (Linear, bias=False) -------------------------------
    text_features = jnp.dot(txt_ref[...], wt_ref[...],
                            preferred_element_type=f32)             # [N, P] f32

    # ----- L2 normalize along last dim (rsqrt on EUP, eps for safety) --------
    eps = 1e-12
    img_norm = image_features * lax.rsqrt(
        jnp.sum(image_features * image_features, axis=-1, keepdims=True) + eps)
    txt_norm = text_features * lax.rsqrt(
        jnp.sum(text_features * text_features, axis=-1, keepdims=True) + eps)

    # ----- logits: contract last dims (txt_norm relayout handled by XLU) -----
    scale = scale_ref[0, 0]                # exp(logit_scale), from SMEM
    logits = lax.dot_general(img_norm, txt_norm,
                             (((1,), (1,)), ((), ())),
                             preferred_element_type=f32)            # [Bp, N]
    logits_img_ref[...] = scale * logits
    # logits_text == logits_img.T exactly; produced in the wrapper.


# ---------------------------------------------------------------------------
# Wrapper
# ---------------------------------------------------------------------------
def custom_clip_forward(image_nchw, txt_pooled, params):
    """image_nchw: [B, C, H, W]; txt_pooled: [N, Dt]; returns (logits_img, logits_txt)."""
    B = image_nchw.shape[0]
    N = txt_pooled.shape[0]
    bf16 = jnp.bfloat16

    # glue: NCHW -> [B, C*H*W]; activations cast to bf16 (f32 accum in-kernel).
    img_flat = image_nchw.reshape(B, -1).astype(bf16)
    # Pad batch rows to a sublane multiple of 8 so no dot sees masked sublanes.
    B_pad = ((B + 7) // 8) * 8
    if B_pad != B:
        img_flat = jnp.pad(img_flat, ((0, B_pad - B), (0, 0)))
    txt_bf = txt_pooled.astype(bf16)

    # logit_scale.exp(): single scalar exp done in the wrapper, passed via SMEM.
    scale_exp = jnp.exp(params["logit_scale"]).astype(jnp.float32)   # [1, 1]

    inputs = (
        img_flat,
        txt_bf,
        params["w_embed"],                 # already bf16 (cast once in make_params)
        params["wv"],
        params["wt"],
        params["w1"],
        params["b1"],                      # biases stay f32 (elementwise adds)
        params["w2"],
        params["b2"],
        scale_exp,
    )

    # No grid: single invocation, whole arrays resident in VMEM, no pipeline
    # prologue/epilogue and no double-buffering of constant weights.
    in_specs = [pl.BlockSpec(memory_space=pltpu.MemorySpace.VMEM)
                for _ in range(len(inputs) - 1)]
    in_specs.append(pl.BlockSpec(memory_space=pltpu.MemorySpace.SMEM))

    logits_pad = pl.pallas_call(
        custom_clip_kernel,
        out_shape=jax.ShapeDtypeStruct((B_pad, N), jnp.float32),
        in_specs=in_specs,
        out_specs=pl.BlockSpec(memory_space=pltpu.MemorySpace.VMEM),
    )(*inputs)

    logits_img = logits_pad[:B]
    # logits_text is exactly the transpose of logits_img (module semantics).
    logits_txt = logits_img.T
    return logits_img, logits_txt


# ---------------------------------------------------------------------------
# Deterministic parameter construction (shapes implied by the module).
# Matmul weights are cast to bf16 HERE, once, so every forward call reads the
# half-size weights straight from HBM with no per-call convert ops.
# ---------------------------------------------------------------------------
def make_params(key, c_flat, dv, dt, proj_dim=512, reduction=4):
    ks = jax.random.split(key, 7)
    s = 0.02
    hid = proj_dim // reduction
    bf16 = jnp.bfloat16
    return {
        # vision pooled-embed stand-in (part of the encoder TODO)
        "w_embed": (s * jax.random.normal(ks[0], (c_flat, dv), jnp.float32)).astype(bf16),
        # HF CLIP projections are Linear(bias=False); stored as [in, out]
        "wv": (s * jax.random.normal(ks[1], (dv, proj_dim), jnp.float32)).astype(bf16),
        "wt": (s * jax.random.normal(ks[2], (dt, proj_dim), jnp.float32)).astype(bf16),
        # Adapter(512, 4)
        "w1": (s * jax.random.normal(ks[3], (proj_dim, hid), jnp.float32)).astype(bf16),
        "b1": jnp.zeros((1, hid), jnp.float32),
        "w2": (s * jax.random.normal(ks[4], (hid, proj_dim), jnp.float32)).astype(bf16),
        "b2": jnp.zeros((1, proj_dim), jnp.float32),
        # CLIP default: logit_scale = log(1/0.07)
        "logit_scale": jnp.full((1, 1), jnp.log(1.0 / 0.07), jnp.float32),
    }


if __name__ == "__main__":
    key = jax.random.PRNGKey(0)
    k_img, k_txt, k_par = jax.random.split(key, 3)

    # small shapes: batch=2, channels=4, spatial=16x16, 8 class prompts,
    # vision hidden Dv=64, text hidden Dt=64, projection dim P=512 (Adapter(512,4))
    B, C, H, W = 2, 4, 16, 16
    N_CLASSES, DV, DT = 8, 64, 64

    image = jax.random.normal(k_img, (B, C, H, W), jnp.float32)          # NCHW
    txt_pooled = jax.random.normal(k_txt, (N_CLASSES, DT), jnp.float32)  # text-encoder stand-in
    params = make_params(k_par, C * H * W, DV, DT)

    logits_img, logits_txt = custom_clip_forward(image, txt_pooled, params)
    jax.block_until_ready((logits_img, logits_txt))

    assert logits_img.shape == (B, N_CLASSES)
    assert logits_txt.shape == (N_CLASSES, B)
    print("KERNEL_OK")
</pallas_src>

<mosaic_0001>
module attributes {stable_mosaic.version = 11 : i64} {
  func.func @custom_clip_kernel(%arg0: memref<8x1024xbf16, #tpu.memory_space<vmem>>, %arg1: memref<8x64xbf16, #tpu.memory_space<vmem>>, %arg2: memref<1024x64xbf16, #tpu.memory_space<vmem>>, %arg3: memref<64x512xbf16, #tpu.memory_space<vmem>>, %arg4: memref<64x512xbf16, #tpu.memory_space<vmem>>, %arg5: memref<512x128xbf16, #tpu.memory_space<vmem>>, %arg6: memref<1x128xf32, #tpu.memory_space<vmem>>, %arg7: memref<128x512xbf16, #tpu.memory_space<vmem>>, %arg8: memref<1x512xf32, #tpu.memory_space<vmem>>, %arg9: memref<1x1xf32, #tpu.memory_space<smem>>, %arg10: memref<8x8xf32, #tpu.memory_space<vmem>>) attributes {dimension_semantics = [], scalar_prefetch = 0 : i64, scratch_operands = 0 : i64, tpu.core_type = #tpu.core_type<tc>} {
    %c0 = arith.constant 0 : index
    %c0_0 = arith.constant 0 : index
    %0 = vector.load %arg0[%c0, %c0_0] : memref<8x1024xbf16, #tpu.memory_space<vmem>>, vector<8x1024xbf16>
    %c0_1 = arith.constant 0 : index
    %c0_2 = arith.constant 0 : index
    %1 = vector.load %arg2[%c0_1, %c0_2] : memref<1024x64xbf16, #tpu.memory_space<vmem>>, vector<1024x64xbf16>
    %cst = arith.constant dense<0.000000e+00> : vector<8x64xf32>
    %2 = tpu.matmul %0, %1, %cst {dimension_numbers = #tpu.dot_dimension_numbers<[1], [0], [0], [1], [0, 0, 1, 1], [], []>} : vector<8x1024xbf16>, vector<1024x64xbf16>, vector<8x64xf32> -> vector<8x64xf32>
    %3 = arith.truncf %2 : vector<8x64xf32> to vector<8x64xbf16>
    %c0_3 = arith.constant 0 : index
    %c0_4 = arith.constant 0 : index
    %4 = vector.load %arg3[%c0_3, %c0_4] : memref<64x512xbf16, #tpu.memory_space<vmem>>, vector<64x512xbf16>
    %cst_5 = arith.constant dense<0.000000e+00> : vector<8x512xf32>
    %5 = tpu.matmul %3, %4, %cst_5 {dimension_numbers = #tpu.dot_dimension_numbers<[1], [0], [0], [1], [0, 0, 1, 1], [], []>} : vector<8x64xbf16>, vector<64x512xbf16>, vector<8x512xf32> -> vector<8x512xf32>
    %c0_6 = arith.constant 0 : index
    %c0_7 = arith.constant 0 : index
    %6 = vector.load %arg6[%c0_6, %c0_7] : memref<1x128xf32, #tpu.memory_space<vmem>>, vector<1x128xf32>
    %c0_8 = arith.constant 0 : index
    %c0_9 = arith.constant 0 : index
    %7 = vector.load %arg8[%c0_8, %c0_9] : memref<1x512xf32, #tpu.memory_space<vmem>>, vector<1x512xf32>
    %8 = arith.truncf %5 : vector<8x512xf32> to vector<8x512xbf16>
    %c0_10 = arith.constant 0 : index
    %c0_11 = arith.constant 0 : index
    %9 = vector.load %arg5[%c0_10, %c0_11] : memref<512x128xbf16, #tpu.memory_space<vmem>>, vector<512x128xbf16>
    %cst_12 = arith.constant dense<0.000000e+00> : vector<8x128xf32>
    %10 = tpu.matmul %8, %9, %cst_12 {dimension_numbers = #tpu.dot_dimension_numbers<[1], [0], [0], [1], [0, 0, 1, 1], [], []>} : vector<8x512xbf16>, vector<512x128xbf16>, vector<8x128xf32> -> vector<8x128xf32>
    %11 = vector.broadcast %6 : vector<1x128xf32> to vector<8x128xf32>
    %12 = arith.addf %10, %11 : vector<8x128xf32>
    %cst_13 = arith.constant 0.000000e+00 : f32
    %13 = vector.broadcast %cst_13 : f32 to vector<8x128xf32>
    %14 = arith.maximumf %12, %13 : vector<8x128xf32>
    %15 = arith.truncf %14 : vector<8x128xf32> to vector<8x128xbf16>
    %c0_14 = arith.constant 0 : index
    %c0_15 = arith.constant 0 : index
    %16 = vector.load %arg7[%c0_14, %c0_15] : memref<128x512xbf16, #tpu.memory_space<vmem>>, vector<128x512xbf16>
    %cst_16 = arith.constant dense<0.000000e+00> : vector<8x512xf32>
    %17 = tpu.matmul %15, %16, %cst_16 {dimension_numbers = #tpu.dot_dimension_numbers<[1], [0], [0], [1], [0, 0, 1, 1], [], []>} : vector<8x128xbf16>, vector<128x512xbf16>, vector<8x512xf32> -> vector<8x512xf32>
    %18 = vector.broadcast %7 : vector<1x512xf32> to vector<8x512xf32>
    %19 = arith.addf %17, %18 : vector<8x512xf32>
    %cst_17 = arith.constant 0.000000e+00 : f32
    %20 = vector.broadcast %cst_17 : f32 to vector<8x512xf32>
    %21 = arith.maximumf %19, %20 : vector<8x512xf32>
    %cst_18 = arith.constant 2.000000e-01 : f32
    %22 = vector.broadcast %cst_18 : f32 to vector<8x512xf32>
    %23 = arith.mulf %22, %21 : vector<8x512xf32>
    %cst_19 = arith.constant 8.000000e-01 : f32
    %24 = vector.broadcast %cst_19 : f32 to vector<8x512xf32>
    %25 = arith.mulf %24, %5 : vector<8x512xf32>
    %26 = arith.addf %23, %25 : vector<8x512xf32>
    %c0_20 = arith.constant 0 : index
    %c0_21 = arith.constant 0 : index
    %27 = vector.load %arg1[%c0_20, %c0_21] : memref<8x64xbf16, #tpu.memory_space<vmem>>, vector<8x64xbf16>
    %c0_22 = arith.constant 0 : index
    %c0_23 = arith.constant 0 : index
    %28 = vector.load %arg4[%c0_22, %c0_23] : memref<64x512xbf16, #tpu.memory_space<vmem>>, vector<64x512xbf16>
    %cst_24 = arith.constant dense<0.000000e+00> : vector<8x512xf32>
    %29 = tpu.matmul %27, %28, %cst_24 {dimension_numbers = #tpu.dot_dimension_numbers<[1], [0], [0], [1], [0, 0, 1, 1], [], []>} : vector<8x64xbf16>, vector<64x512xbf16>, vector<8x512xf32> -> vector<8x512xf32>
    %30 = arith.mulf %26, %26 : vector<8x512xf32>
    %cst_25 = arith.constant dense<0.000000e+00> : vector<8xf32>
    %31 = vector.multi_reduction <add>, %30, %cst_25 [1] : vector<8x512xf32> to vector<8xf32>
    %32 = vector.shape_cast %31 : vector<8xf32> to vector<8x1xf32>
    %cst_26 = arith.constant 9.99999996E-13 : f32
    %33 = vector.broadcast %cst_26 : f32 to vector<8x1xf32>
    %34 = arith.addf %32, %33 : vector<8x1xf32>
    %35 = math.rsqrt %34 : vector<8x1xf32>
    %36 = vector.broadcast %35 : vector<8x1xf32> to vector<8x512xf32>
    %37 = arith.mulf %26, %36 : vector<8x512xf32>
    %38 = arith.mulf %29, %29 : vector<8x512xf32>
    %cst_27 = arith.constant dense<0.000000e+00> : vector<8xf32>
    %39 = vector.multi_reduction <add>, %38, %cst_27 [1] : vector<8x512xf32> to vector<8xf32>
    %40 = vector.shape_cast %39 : vector<8xf32> to vector<8x1xf32>
    %cst_28 = arith.constant 9.99999996E-13 : f32
    %41 = vector.broadcast %cst_28 : f32 to vector<8x1xf32>
    %42 = arith.addf %40, %41 : vector<8x1xf32>
    %43 = math.rsqrt %42 : vector<8x1xf32>
    %44 = vector.broadcast %43 : vector<8x1xf32> to vector<8x512xf32>
    %45 = arith.mulf %29, %44 : vector<8x512xf32>
    %c0_29 = arith.constant 0 : index
    %c0_30 = arith.constant 0 : index
    %46 = memref.load %arg9[%c0_29, %c0_30] : memref<1x1xf32, #tpu.memory_space<smem>>
    %cst_31 = arith.constant dense<0.000000e+00> : vector<8x8xf32>
    %47 = tpu.matmul %37, %45, %cst_31 {dimension_numbers = #tpu.dot_dimension_numbers<[1], [1], [0], [0], [0, 0, 1, 0], [], []>} : vector<8x512xf32>, vector<8x512xf32>, vector<8x8xf32> -> vector<8x8xf32>
    %48 = vector.broadcast %46 : f32 to vector<8x8xf32>
    %49 = arith.mulf %48, %47 : vector<8x8xf32>
    %c0_32 = arith.constant 0 : index
    %c0_33 = arith.constant 0 : index
    %50 = vector.load %arg10[%c0_32, %c0_33] : memref<8x8xf32, #tpu.memory_space<vmem>>, vector<8x8xf32>
    tpu.vector_store %arg10[%c0_32, %c0_33], %49 {strides = array<i32>} : memref<8x8xf32, #tpu.memory_space<vmem>>, vector<8x8xf32>,
    return
  }
}

</mosaic_0001>

<llo_original>
// kernel: tpu_custom_call.1
$region0: #{tpu_custom_call.1}
  #allocation0 [shape = 'u32[]', space=smem, size = 0x4, offset = 0x4, fixed_abs, tag = 'smem constant byte address 0x4 - core index']
  #allocation1 [shape = 'u32[144,128]{1,0:T(1,128)}', space=vmem, size = 0x12000, scoped, tag = 'internal scratch']
  #allocation2 [shape = 'f32[1,1]{1,0:T(1,128)S(6)}', space=smem, size = 0x200, scoped, tag = 'scoped memory for tpu_custom_call.1']
  %s0 = inlined_call_operand.hbm [shape: bf16[8,1024], index: 0, kind: input, shape index: {}]
  %s1 = inlined_call_operand.hbm [shape: bf16[8,64], index: 1, kind: input, shape index: {}]
  %s2 = inlined_call_operand.vmem [shape: bf16[1024,64], index: 2, kind: input, shape index: {}]
  %s3 = inlined_call_operand.vmem [shape: bf16[64,512], index: 3, kind: input, shape index: {}]
  %s4 = inlined_call_operand.vmem [shape: bf16[64,512], index: 4, kind: input, shape index: {}]
  %s5 = inlined_call_operand.vmem [shape: bf16[512,128], index: 5, kind: input, shape index: {}]
  %s6 = inlined_call_operand.vmem [shape: f32[1,128], index: 6, kind: input, shape index: {}]
  %s7 = inlined_call_operand.vmem [shape: bf16[128,512], index: 7, kind: input, shape index: {}]
  %s8 = inlined_call_operand.vmem [shape: f32[1,512], index: 8, kind: input, shape index: {}]
  %s9 = inlined_call_operand.<no memory space> [shape: f32[1,1], index: 9, kind: input, shape index: {}]
  %s10 = inlined_call_operand.hbm [shape: f32[8,8], index: 10, kind: output, shape index: {}]
  %s11 = sld [smem:[#allocation0]]
  $region58: #{tpu_custom_call.1} parent=0
    _
  %s13 = ssub.s32 1, %s11
  %s14 = scalar_select 0, %s13, %s11
  %15 = sst [smem:[#allocation2]] %s9
  $region1: #{tpu_custom_call.1} parent=0
    #allocation3 [shape = 'u8[16384]{0}', space=vmem, size = 0x4000, scoped, tag = 'input window, operand 0, single buffered']
    #allocation4 [shape = 's32[1]{0}', space=sflag, size = 0x4, scoped, tag = 'scoped memory for tpu_custom_call.1']
    #allocation5 [shape = 's32[1]{0}', space=sflag, size = 0x4, scoped, tag = 'scoped memory for tpu_custom_call.1']
    #allocation6 [shape = 'u8[2048]{0}', space=vmem, size = 0x800, scoped, tag = 'input window, operand 1, single buffered']
    #allocation7 [shape = 's32[1]{0}', space=sflag, size = 0x4, scoped, tag = 'scoped memory for tpu_custom_call.1']
    #allocation8 [shape = 'u8[4096]{0}', space=vmem, size = 0x1000, scoped, tag = 'output window, operand 0, single buffered']
    %16 = vsyncpa [#allocation4], 0
    %17 = vsyncpa [#allocation7], 0
    %18 = vsyncpa [#allocation5], 0
    // Predicated region
    $region2: #{tpu_custom_call.1} parent=1 // pred_check
      _
    $region3: #{tpu_custom_call.1} parent=1 // pred_check_branch
      %20 = sbr.rel (0) target = $region5
    $region4: #{tpu_custom_call.1} parent=1 // pred_region
      %s22 = ssub.s32 512, 512
      %23 = vsyncadd [#allocation4], %s22
      %s25 = sshll.u32 [#allocation3], 4
      %s26 = int_to_ptr.vmem [resolvable:$true] %s25
      %28 = dma.hbm_to_vmem [thread:$0]  %s0, 512, %s26, [#allocation4]
    $region5: #{tpu_custom_call.1} parent=1 // pred_fallthru
      _
    // Predicated region
    $region6: #{tpu_custom_call.1} parent=1 // pred_check
      _
    $region7: #{tpu_custom_call.1} parent=1 // pred_check_branch
      %30 = sbr.rel (0) target = $region9
    $region8: #{tpu_custom_call.1} parent=1 // pred_region
      %s32 = ssub.s32 64, 64
      %33 = vsyncadd [#allocation7], %s32
      %s35 = sshll.u32 [#allocation6], 4
      %s36 = int_to_ptr.vmem [resolvable:$true] %s35
      %38 = dma.hbm_to_vmem [thread:$0]  %s1, 64, %s36, [#allocation7]
    $region9: #{tpu_custom_call.1} parent=1 // pred_fallthru
      _
    // Predicated region
    $region10: #{tpu_custom_call.1} parent=1 // pred_check
      _
    $region11: #{tpu_custom_call.1} parent=1 // pred_check_branch
      %40 = sbr.rel (0) target = $region13
    $region12: #{tpu_custom_call.1} parent=1 // pred_region
      _
    $region13: #{tpu_custom_call.1} parent=1 // pred_fallthru
      _
    // Predicated region
    $region14: #{tpu_custom_call.1} parent=1 // pred_check
      _
    $region15: #{tpu_custom_call.1} parent=1 // pred_check_branch
      %42 = sbr.rel (0) target = $region17
    $region16: #{tpu_custom_call.1} parent=1 // pred_region
      _
    $region17: #{tpu_custom_call.1} parent=1 // pred_fallthru
      _
    // Predicated region
    $region18: #{tpu_custom_call.1} parent=1 // pred_check
      _
    $region19: #{tpu_custom_call.1} parent=1 // pred_check_branch
      %44 = sbr.rel (0) target = $region21
    $region20: #{tpu_custom_call.1} parent=1 // pred_region
      _
    $region21: #{tpu_custom_call.1} parent=1 // pred_fallthru
      _
    // Predicated region
    $region22: #{tpu_custom_call.1} parent=1 // pred_check
      _
    $region23: #{tpu_custom_call.1} parent=1 // pred_check_branch
      %46 = sbr.rel (0) target = $region25
    $region24: #{tpu_custom_call.1} parent=1 // pred_region
      _
    $region25: #{tpu_custom_call.1} parent=1 // pred_fallthru
      _
    // Predicated region
    $region26: #{tpu_custom_call.1} parent=1 // pred_check
      _
    $region27: #{tpu_custom_call.1} parent=1 // pred_check_branch
      %48 = sbr.rel (0) target = $region29
    $region28: #{tpu_custom_call.1} parent=1 // pred_region
      _
    $region29: #{tpu_custom_call.1} parent=1 // pred_fallthru
      _
    // Predicated region
    $region30: #{tpu_custom_call.1} parent=1 // pred_check
      _
    $region31: #{tpu_custom_call.1} parent=1 // pred_check_branch
      %50 = sbr.rel (0) target = $region33
    $region32: #{tpu_custom_call.1} parent=1 // pred_region
      _
    $region33: #{tpu_custom_call.1} parent=1 // pred_fallthru
      _
    // Predicated region
    $region34: #{tpu_custom_call.1} parent=1 // pred_check
      _
    $region35: #{tpu_custom_call.1} parent=1 // pred_check_branch
      %52 = sbr.rel (0) target = $region37
    $region36: #{tpu_custom_call.1} parent=1 // pred_region
      _
    $region37: #{tpu_custom_call.1} parent=1 // pred_fallthru
      _
    // Predicated region
    $region38: #{tpu_custom_call.1} parent=1 // pred_check
      _
    $region39: #{tpu_custom_call.1} parent=1 // pred_check_branch
      %54 = sbr.rel (0) target = $region41
    $region40: #{tpu_custom_call.1} parent=1 // pred_region
      _
    $region41: #{tpu_custom_call.1} parent=1 // pred_fallthru
      _
    // Predicated region
    $region42: #{tpu_custom_call.1} parent=1 // pred_check
      _
    $region43: #{tpu_custom_call.1} parent=1 // pred_check_branch
      %56 = sbr.rel (0) target = $region45
    $region44: #{tpu_custom_call.1} parent=1 // pred_region
      %57 = dma.done [#allocation4], 512
    $region45: #{tpu_custom_call.1} parent=1 // pred_fallthru
      _
    // Predicated region
    $region46: #{tpu_custom_call.1} parent=1 // pred_check
      _
    $region47: #{tpu_custom_call.1} parent=1 // pred_check_branch
      %59 = sbr.rel (0) target = $region49
    $region48: #{tpu_custom_call.1} parent=1 // pred_region
      %60 = dma.done [#allocation7], 64
    $region49: #{tpu_custom_call.1} parent=1 // pred_fallthru
      _
    %v62 = vld [vmem:[#allocation3] sm:$0xff]
    %v63 = vld [vmem:[#allocation3 + $0x8] sm:$0xff]
    %v64 = vld [vmem:[#allocation3 + $0x10] sm:$0xff]
    %v65 = vld [vmem:[#allocation3 + $0x18] sm:$0xff]
    %v66 = vld [vmem:[%s2] sm:$0xf]
    %v67 = vld [vmem:[%s2 + $0x4] sm:$0xf]
    %v68 = vld [vmem:[%s2 + $0x8] sm:$0xf]
    %v69 = vld [vmem:[%s2 + $0xc] sm:$0xf]
    %v70 = vld [vmem:[%s2 + $0x10] sm:$0xf]
    %v71 = vld [vmem:[%s2 + $0x14] sm:$0xf]
    %v72 = vld [vmem:[%s2 + $0x18] sm:$0xf]
    %v73 = vld [vmem:[%s2 + $0x1c] sm:$0xf]
    %v74 = vld [vmem:[%s2 + $0x20] sm:$0xf]
    %v75 = vld [vmem:[%s2 + $0x24] sm:$0xf]
    %v76 = vld [vmem:[%s2 + $0x28] sm:$0xf]
    %v77 = vld [vmem:[%s2 + $0x2c] sm:$0xf]
    %v78 = vld [vmem:[%s2 + $0x30] sm:$0xf]
    %v79 = vld [vmem:[%s2 + $0x34] sm:$0xf]
    %v80 = vld [vmem:[%s2 + $0x38] sm:$0xf]
    %v81 = vld [vmem:[%s2 + $0x3c] sm:$0xf]
    %v82 = vld [vmem:[%s2 + $0x40] sm:$0xf]
    %v83 = vld [vmem:[%s2 + $0x44] sm:$0xf]
    %v84 = vld [vmem:[%s2 + $0x48] sm:$0xf]
    %v85 = vld [vmem:[%s2 + $0x4c] sm:$0xf]
    %v86 = vld [vmem:[%s2 + $0x50] sm:$0xf]
    %v87 = vld [vmem:[%s2 + $0x54] sm:$0xf]
    %v88 = vld [vmem:[%s2 + $0x58] sm:$0xf]
    %v89 = vld [vmem:[%s2 + $0x5c] sm:$0xf]
    %v90 = vld [vmem:[%s2 + $0x60] sm:$0xf]
    %v91 = vld [vmem:[%s2 + $0x64] sm:$0xf]
    %v92 = vld [vmem:[%s2 + $0x68] sm:$0xf]
    %v93 = vld [vmem:[%s2 + $0x6c] sm:$0xf]
    %v94 = vld [vmem:[%s2 + $0x70] sm:$0xf]
    %v95 = vld [vmem:[%s2 + $0x74] sm:$0xf]
    %v96 = vld [vmem:[%s2 + $0x78] sm:$0xf]
    %v97 = vld [vmem:[%s2 + $0x7c] sm:$0xf]
    %v98 = vld [vmem:[%s2 + $0x80] sm:$0xf]
    %v99 = vld [vmem:[%s2 + $0x84] sm:$0xf]
    %v100 = vld [vmem:[%s2 + $0x88] sm:$0xf]
    %v101 = vld [vmem:[%s2 + $0x8c] sm:$0xf]
    %v102 = vld [vmem:[%s2 + $0x90] sm:$0xf]
    %v103 = vld [vmem:[%s2 + $0x94] sm:$0xf]
    %v104 = vld [vmem:[%s2 + $0x98] sm:$0xf]
    %v105 = vld [vmem:[%s2 + $0x9c] sm:$0xf]
    %v106 = vld [vmem:[%s2 + $0xa0] sm:$0xf]
    %v107 = vld [vmem:[%s2 + $0xa4] sm:$0xf]
    %v108 = vld [vmem:[%s2 + $0xa8] sm:$0xf]
    %v109 = vld [vmem:[%s2 + $0xac] sm:$0xf]
    %v110 = vld [vmem:[%s2 + $0xb0] sm:$0xf]
    %v111 = vld [vmem:[%s2 + $0xb4] sm:$0xf]
    %v112 = vld [vmem:[%s2 + $0xb8] sm:$0xf]
    %v113 = vld [vmem:[%s2 + $0xbc] sm:$0xf]
    %v114 = vld [vmem:[%s2 + $0xc0] sm:$0xf]
    %v115 = vld [vmem:[%s2 + $0xc4] sm:$0xf]
    %v116 = vld [vmem:[%s2 + $0xc8] sm:$0xf]
    %v117 = vld [vmem:[%s2 + $0xcc] sm:$0xf]
    %v118 = vld [vmem:[%s2 + $0xd0] sm:$0xf]
    %v119 = vld [vmem:[%s2 + $0xd4] sm:$0xf]
    %v120 = vld [vmem:[%s2 + $0xd8] sm:$0xf]
    %v121 = vld [vmem:[%s2 + $0xdc] sm:$0xf]
    %v122 = vld [vmem:[%s2 + $0xe0] sm:$0xf]
    %v123 = vld [vmem:[%s2 + $0xe4] sm:$0xf]
    %v124 = vld [vmem:[%s2 + $0xe8] sm:$0xf]
    %v125 = vld [vmem:[%s2 + $0xec] sm:$0xf]
    %v126 = vld [vmem:[%s2 + $0xf0] sm:$0xf]
    %v127 = vld [vmem:[%s2 + $0xf4] sm:$0xf]
    %v128 = vld [vmem:[%s2 + $0xf8] sm:$0xf]
    %v129 = vld [vmem:[%s2 + $0xfc] sm:$0xf]
    %v130 = vld [vmem:[%s2 + $0x100] sm:$0xf]
    %v131 = vld [vmem:[%s2 + $0x104] sm:$0xf]
    %v132 = vld [vmem:[%s2 + $0x108] sm:$0xf]
    %v133 = vld [vmem:[%s2 + $0x10c] sm:$0xf]
    %v134 = vld [vmem:[%s2 + $0x110] sm:$0xf]
    %v135 = vld [vmem:[%s2 + $0x114] sm:$0xf]
    %v136 = vld [vmem:[%s2 + $0x118] sm:$0xf]
    %v137 = vld [vmem:[%s2 + $0x11c] sm:$0xf]
    %v138 = vld [vmem:[%s2 + $0x120] sm:$0xf]
    %v139 = vld [vmem:[%s2 + $0x124] sm:$0xf]
    %v140 = vld [vmem:[%s2 + $0x128] sm:$0xf]
    %v141 = vld [vmem:[%s2 + $0x12c] sm:$0xf]
    %v142 = vld [vmem:[%s2 + $0x130] sm:$0xf]
    %v143 = vld [vmem:[%s2 + $0x134] sm:$0xf]
    %v144 = vld [vmem:[%s2 + $0x138] sm:$0xf]
    %v145 = vld [vmem:[%s2 + $0x13c] sm:$0xf]
    %v146 = vld [vmem:[%s2 + $0x140] sm:$0xf]
    %v147 = vld [vmem:[%s2 + $0x144] sm:$0xf]
    %v148 = vld [vmem:[%s2 + $0x148] sm:$0xf]
    %v149 = vld [vmem:[%s2 + $0x14c] sm:$0xf]
    %v150 = vld [vmem:[%s2 + $0x150] sm:$0xf]
    %v151 = vld [vmem:[%s2 + $0x154] sm:$0xf]
    %v152 = vld [vmem:[%s2 + $0x158] sm:$0xf]
    %v153 = vld [vmem:[%s2 + $0x15c] sm:$0xf]
    %v154 = vld [vmem:[%s2 + $0x160] sm:$0xf]
    %v155 = vld [vmem:[%s2 + $0x164] sm:$0xf]
    %v156 = vld [vmem:[%s2 + $0x168] sm:$0xf]
    %v157 = vld [vmem:[%s2 + $0x16c] sm:$0xf]
    %v158 = vld [vmem:[%s2 + $0x170] sm:$0xf]
    %v159 = vld [vmem:[%s2 + $0x174] sm:$0xf]
    %v160 = vld [vmem:[%s2 + $0x178] sm:$0xf]
    %v161 = vld [vmem:[%s2 + $0x17c] sm:$0xf]
    %v162 = vld [vmem:[%s2 + $0x180] sm:$0xf]
    %v163 = vld [vmem:[%s2 + $0x184] sm:$0xf]
    %v164 = vld [vmem:[%s2 + $0x188] sm:$0xf]
    %v165 = vld [vmem:[%s2 + $0x18c] sm:$0xf]
    %v166 = vld [vmem:[%s2 + $0x190] sm:$0xf]
    %v167 = vld [vmem:[%s2 + $0x194] sm:$0xf]
    %v168 = vld [vmem:[%s2 + $0x198] sm:$0xf]
    %v169 = vld [vmem:[%s2 + $0x19c] sm:$0xf]
    %v170 = vld [vmem:[%s2 + $0x1a0] sm:$0xf]
    %v171 = vld [vmem:[%s2 + $0x1a4] sm:$0xf]
    %v172 = vld [vmem:[%s2 + $0x1a8] sm:$0xf]
    %v173 = vld [vmem:[%s2 + $0x1ac] sm:$0xf]
    %v174 = vld [vmem:[%s2 + $0x1b0] sm:$0xf]
    %v175 = vld [vmem:[%s2 + $0x1b4] sm:$0xf]
    %v176 = vld [vmem:[%s2 + $0x1b8] sm:$0xf]
    %v177 = vld [vmem:[%s2 + $0x1bc] sm:$0xf]
    %v178 = vld [vmem:[%s2 + $0x1c0] sm:$0xf]
    %v179 = vld [vmem:[%s2 + $0x1c4] sm:$0xf]
    %v180 = vld [vmem:[%s2 + $0x1c8] sm:$0xf]
    %v181 = vld [vmem:[%s2 + $0x1cc] sm:$0xf]
    %v182 = vld [vmem:[%s2 + $0x1d0] sm:$0xf]
    %v183 = vld [vmem:[%s2 + $0x1d4] sm:$0xf]
    %v184 = vld [vmem:[%s2 + $0x1d8] sm:$0xf]
    %v185 = vld [vmem:[%s2 + $0x1dc] sm:$0xf]
    %v186 = vld [vmem:[%s2 + $0x1e0] sm:$0xf]
    %v187 = vld [vmem:[%s2 + $0x1e4] sm:$0xf]
    %v188 = vld [vmem:[%s2 + $0x1e8] sm:$0xf]
    %v189 = vld [vmem:[%s2 + $0x1ec] sm:$0xf]
    %v190 = vld [vmem:[%s2 + $0x1f0] sm:$0xf]
    %v191 = vld [vmem:[%s2 + $0x1f4] sm:$0xf]
    %v192 = vld [vmem:[%s2 + $0x1f8] sm:$0xf]
    %v193 = vld [vmem:[%s2 + $0x1fc] sm:$0xf]
    %v198 = vunpack.c.l.b16 %v62
    %v199 = vunpack.c.h.b16 %v62
    %v200 = vunpack.c.l.b16 %v63
    %v201 = vunpack.c.h.b16 %v63
    %v202 = vunpack.c.l.b16 %v64
    %v203 = vunpack.c.h.b16 %v64
    %v204 = vunpack.c.l.b16 %v65
    %v205 = vunpack.c.h.b16 %v65
    %v206 = vpack.c.b16 %v198, %v198
    %v207 = vpack.c.b16 %v199, %v199
    %v208 = vpack.c.b16 %v200, %v200
    %v209 = vpack.c.b16 %v201, %v201
    %v210 = vpack.c.b16 %v202, %v202
    %v211 = vpack.c.b16 %v203, %v203
    %v212 = vpack.c.b16 %v204, %v204
    %v213 = vpack.c.b16 %v205, %v205
    %v350 = vunpack.c.l.b16 %v66
    %v351 = vunpack.c.l.b16 %v67
    %v352 = vunpack.c.l.b16 %v68
    %v353 = vunpack.c.l.b16 %v69
    %v354 = vunpack.c.l.b16 %v70
    %v355 = vunpack.c.l.b16 %v71
    %v356 = vunpack.c.l.b16 %v72
    %v357 = vunpack.c.l.b16 %v73
    %v358 = vunpack.c.l.b16 %v74
    %v359 = vunpack.c.l.b16 %v75
    %v360 = vunpack.c.l.b16 %v76
    %v361 = vunpack.c.l.b16 %v77
    %v362 = vunpack.c.l.b16 %v78
    %v363 = vunpack.c.l.b16 %v79
    %v364 = vunpack.c.l.b16 %v80
    %v365 = vunpack.c.l.b16 %v81
    %v366 = vunpack.c.l.b16 %v82
    %v367 = vunpack.c.l.b16 %v83
    %v368 = vunpack.c.l.b16 %v84
    %v369 = vunpack.c.l.b16 %v85
    %v370 = vunpack.c.l.b16 %v86
    %v371 = vunpack.c.l.b16 %v87
    %v372 = vunpack.c.l.b16 %v88
    %v373 = vunpack.c.l.b16 %v89
    %v374 = vunpack.c.l.b16 %v90
    %v375 = vunpack.c.l.b16 %v91
    %v376 = vunpack.c.l.b16 %v92
    %v377 = vunpack.c.l.b16 %v93
    %v378 = vunpack.c.l.b16 %v94
    %v379 = vunpack.c.l.b16 %v95
    %v380 = vunpack.c.l.b16 %v96
    %v381 = vunpack.c.l.b16 %v97
    %v382 = vunpack.c.l.b16 %v98
    %v383 = vunpack.c.l.b16 %v99
    %v384 = vunpack.c.l.b16 %v100
    %v385 = vunpack.c.l.b16 %v101
    %v386 = vunpack.c.l.b16 %v102
    %v387 = vunpack.c.l.b16 %v103
    %v388 = vunpack.c.l.b16 %v104
    %v389 = vunpack.c.l.b16 %v105
    %v390 = vunpack.c.l.b16 %v106
    %v391 = vunpack.c.l.b16 %v107
    %v392 = vunpack.c.l.b16 %v108
    %v393 = vunpack.c.l.b16 %v109
    %v394 = vunpack.c.l.b16 %v110
    %v395 = vunpack.c.l.b16 %v111
    %v396 = vunpack.c.l.b16 %v112
    %v397 = vunpack.c.l.b16 %v113
    %v398 = vunpack.c.l.b16 %v114
    %v399 = vunpack.c.l.b16 %v115
    %v400 = vunpack.c.l.b16 %v116
    %v401 = vunpack.c.l.b16 %v117
    %v402 = vunpack.c.l.b16 %v118
    %v403 = vunpack.c.l.b16 %v119
    %v404 = vunpack.c.l.b16 %v120
    %v405 = vunpack.c.l.b16 %v121
    %v406 = vunpack.c.l.b16 %v122
    %v407 = vunpack.c.l.b16 %v123
    %v408 = vunpack.c.l.b16 %v124
    %v409 = vunpack.c.l.b16 %v125
    %v410 = vunpack.c.l.b16 %v126
    %v411 = vunpack.c.l.b16 %v127
    %v412 = vunpack.c.l.b16 %v128
    %v413 = vunpack.c.l.b16 %v129
    %v414 = vunpack.c.l.b16 %v130
    %v415 = vunpack.c.l.b16 %v131
    %v416 = vunpack.c.l.b16 %v132
    %v417 = vunpack.c.l.b16 %v133
    %v418 = vunpack.c.l.b16 %v134
    %v419 = vunpack.c.l.b16 %v135
    %v420 = vunpack.c.l.b16 %v136
    %v421 = vunpack.c.l.b16 %v137
    %v422 = vunpack.c.l.b16 %v138
    %v423 = vunpack.c.l.b16 %v139
    %v424 = vunpack.c.l.b16 %v140
    %v425 = vunpack.c.l.b16 %v141
    %v426 = vunpack.c.l.b16 %v142
    %v427 = vunpack.c.l.b16 %v143
    %v428 = vunpack.c.l.b16 %v144
    %v429 = vunpack.c.l.b16 %v145
    %v430 = vunpack.c.l.b16 %v146
    %v431 = vunpack.c.l.b16 %v147
    %v432 = vunpack.c.l.b16 %v148
    %v433 = vunpack.c.l.b16 %v149
    %v434 = vunpack.c.l.b16 %v150
    %v435 = vunpack.c.l.b16 %v151
    %v436 = vunpack.c.l.b16 %v152
    %v437 = vunpack.c.l.b16 %v153
    %v438 = vunpack.c.l.b16 %v154
    %v439 = vunpack.c.l.b16 %v155
    %v440 = vunpack.c.l.b16 %v156
    %v441 = vunpack.c.l.b16 %v157
    %v442 = vunpack.c.l.b16 %v158
    %v443 = vunpack.c.l.b16 %v159
    %v444 = vunpack.c.l.b16 %v160
    %v445 = vunpack.c.l.b16 %v161
    %v446 = vunpack.c.l.b16 %v162
    %v447 = vunpack.c.l.b16 %v163
    %v448 = vunpack.c.l.b16 %v164
    %v449 = vunpack.c.l.b16 %v165
    %v450 = vunpack.c.l.b16 %v166
    %v451 = vunpack.c.l.b16 %v167
    %v452 = vunpack.c.l.b16 %v168
    %v453 = vunpack.c.l.b16 %v169
    %v454 = vunpack.c.l.b16 %v170
    %v455 = vunpack.c.l.b16 %v171
    %v456 = vunpack.c.l.b16 %v172
    %v457 = vunpack.c.l.b16 %v173
    %v458 = vunpack.c.l.b16 %v174
    %v459 = vunpack.c.l.b16 %v175
    %v460 = vunpack.c.l.b16 %v176
    %v461 = vunpack.c.l.b16 %v177
    %v462 = vunpack.c.l.b16 %v178
    %v463 = vunpack.c.l.b16 %v179
    %v464 = vunpack.c.l.b16 %v180
    %v465 = vunpack.c.l.b16 %v181
    %v466 = vunpack.c.l.b16 %v182
    %v467 = vunpack.c.l.b16 %v183
    %v468 = vunpack.c.l.b16 %v184
    %v469 = vunpack.c.l.b16 %v185
    %v470 = vunpack.c.l.b16 %v186
    %v471 = vunpack.c.l.b16 %v187
    %v472 = vunpack.c.l.b16 %v188
    %v473 = vunpack.c.l.b16 %v189
    %v474 = vunpack.c.l.b16 %v190
    %v475 = vunpack.c.l.b16 %v191
    %v476 = vunpack.c.l.b16 %v192
    %v477 = vunpack.c.l.b16 %v193
    %v478 = vpack.c.b16 %v351, %v350
    %v479 = vpack.c.b16 %v353, %v352
    %v480 = vpack.c.b16 %v355, %v354
    %v481 = vpack.c.b16 %v357, %v356
    %v482 = vpack.c.b16 %v359, %v358
    %v483 = vpack.c.b16 %v361, %v360
    %v484 = vpack.c.b16 %v363, %v362
    %v485 = vpack.c.b16 %v365, %v364
    %v486 = vpack.c.b16 %v367, %v366
    %v487 = vpack.c.b16 %v369, %v368
    %v488 = vpack.c.b16 %v371, %v370
    %v489 = vpack.c.b16 %v373, %v372
    %v490 = vpack.c.b16 %v375, %v374
    %v491 = vpack.c.b16 %v377, %v376
    %v492 = vpack.c.b16 %v379, %v378
    %v493 = vpack.c.b16 %v381, %v380
    %v494 = vpack.c.b16 %v383, %v382
    %v495 = vpack.c.b16 %v385, %v384
    %v496 = vpack.c.b16 %v387, %v386
    %v497 = vpack.c.b16 %v389, %v388
    %v498 = vpack.c.b16 %v391, %v390
    %v499 = vpack.c.b16 %v393, %v392
    %v500 = vpack.c.b16 %v395, %v394
    %v501 = vpack.c.b16 %v397, %v396
    %v502 = vpack.c.b16 %v399, %v398
    %v503 = vpack.c.b16 %v401, %v400
    %v504 = vpack.c.b16 %v403, %v402
    %v505 = vpack.c.b16 %v405, %v404
    %v506 = vpack.c.b16 %v407, %v406
    %v507 = vpack.c.b16 %v409, %v408
    %v508 = vpack.c.b16 %v411, %v410
    %v509 = vpack.c.b16 %v413, %v412
    %v510 = vpack.c.b16 %v415, %v414
    %v511 = vpack.c.b16 %v417, %v416
    %v512 = vpack.c.b16 %v419, %v418
    %v513 = vpack.c.b16 %v421, %v420
    %v514 = vpack.c.b16 %v423, %v422
    %v515 = vpack.c.b16 %v425, %v424
    %v516 = vpack.c.b16 %v427, %v426
    %v517 = vpack.c.b16 %v429, %v428
    %v518 = vpack.c.b16 %v431, %v430
    %v519 = vpack.c.b16 %v433, %v432
    %v520 = vpack.c.b16 %v435, %v434
    %v521 = vpack.c.b16 %v437, %v436
    %v522 = vpack.c.b16 %v439, %v438
    %v523 = vpack.c.b16 %v441, %v440
    %v524 = vpack.c.b16 %v443, %v442
    %v525 = vpack.c.b16 %v445, %v444
    %v526 = vpack.c.b16 %v447, %v446
    %v527 = vpack.c.b16 %v449, %v448
    %v528 = vpack.c.b16 %v451, %v450
    %v529 = vpack.c.b16 %v453, %v452
    %v530 = vpack.c.b16 %v455, %v454
    %v531 = vpack.c.b16 %v457, %v456
    %v532 = vpack.c.b16 %v459, %v458
    %v533 = vpack.c.b16 %v461, %v460
    %v534 = vpack.c.b16 %v463, %v462
    %v535 = vpack.c.b16 %v465, %v464
    %v536 = vpack.c.b16 %v467, %v466
    %v537 = vpack.c.b16 %v469, %v468
    %v538 = vpack.c.b16 %v471, %v470
    %v539 = vpack.c.b16 %v473, %v472
    %v540 = vpack.c.b16 %v475, %v474
    %v541 = vpack.c.b16 %v477, %v476
    %606 = vmatprep.subr.bf16.mxu0 0
    %607 = vmatpush1.bf16.msra.mxu0 %v485
    %608 = vmatprep.subr.bf16.mxu0 0
    %609 = vmatpush1.bf16.msra.mxu0 %v484
    %610 = vmatprep.subr.bf16.mxu0 0
    %611 = vmatpush1.bf16.msra.mxu0 %v483
    %612 = vmatprep.subr.bf16.mxu0 0
    %613 = vmatpush1.bf16.msra.mxu0 %v482
    %614 = vmatprep.subr.bf16.mxu0 0
    %615 = vmatpush1.bf16.msra.mxu0 %v481
    %616 = vmatprep.subr.bf16.mxu0 0
    %617 = vmatpush1.bf16.msra.mxu0 %v480
    %618 = vmatprep.subr.bf16.mxu0 0
    %619 = vmatpush1.bf16.msra.mxu0 %v479
    %620 = vmatprep.subr.bf16.mxu0 0
    %621 = vmatpush1.bf16.msra.mxu0 %v478
    %622 = vmatprep.subr.bf16.mxu0 0
    %623 = vmatpush2.bf16.msra.mxu0 %v493
    %624 = vmatprep.subr.bf16.mxu0 0
    %625 = vmatpush2.bf16.msra.mxu0 %v492
    %626 = vmatprep.subr.bf16.mxu0 0
    %627 = vmatpush2.bf16.msra.mxu0 %v491
    %628 = vmatprep.subr.bf16.mxu0 0
    %629 = vmatpush2.bf16.msra.mxu0 %v490
    %630 = vmatprep.subr.bf16.mxu0 0
    %631 = vmatpush2.bf16.msra.mxu0 %v489
    %632 = vmatprep.subr.bf16.mxu0 0
    %633 = vmatpush2.bf16.msra.mxu0 %v488
    %634 = vmatprep.subr.bf16.mxu0 0
    %635 = vmatpush2.bf16.msra.mxu0 %v487
    %636 = vmatprep.subr.bf16.mxu0 0
    %637 = vmatpush2.bf16.msra.mxu0 %v486
    %638 = vmatprep.mubr.bf16.mxu0 %v207
    %639 = vmatmul.mubr.bf16.gmra.mxu0 %v206
    %v640 = vpop.f32.mrf.mxu0
    %v641 = vadd.f32 0.0, %v640
    %v642 = vpop.f32.mrf.mxu0
    %v643 = vpop.f32.mrf.mxu0
    %v644 = vpop.f32.mrf.mxu0
    %645 = vdwg.mxu0
    %646 = vmatprep.subr.bf16.mxu0 0
    %647 = vmatpush1.bf16.msra.mxu0 %v501
    %648 = vmatprep.subr.bf16.mxu0 0
    %649 = vmatpush1.bf16.msra.mxu0 %v500
    %650 = vmatprep.subr.bf16.mxu0 0
    %651 = vmatpush1.bf16.msra.mxu0 %v499
    %652 = vmatprep.subr.bf16.mxu0 0
    %653 = vmatpush1.bf16.msra.mxu0 %v498
    %654 = vmatprep.subr.bf16.mxu0 0
    %655 = vmatpush1.bf16.msra.mxu0 %v497
    %656 = vmatprep.subr.bf16.mxu0 0
    %657 = vmatpush1.bf16.msra.mxu0 %v496
    %658 = vmatprep.subr.bf16.mxu0 0
    %659 = vmatpush1.bf16.msra.mxu0 %v495
    %660 = vmatprep.subr.bf16.mxu0 0
    %661 = vmatpush1.bf16.msra.mxu0 %v494
    %662 = vmatprep.subr.bf16.mxu0 0
    %663 = vmatpush2.bf16.msra.mxu0 %v509
    %664 = vmatprep.subr.bf16.mxu0 0
    %665 = vmatpush2.bf16.msra.mxu0 %v508
    %666 = vmatprep.subr.bf16.mxu0 0
    %667 = vmatpush2.bf16.msra.mxu0 %v507
    %668 = vmatprep.subr.bf16.mxu0 0
    %669 = vmatpush2.bf16.msra.mxu0 %v506
    %670 = vmatprep.subr.bf16.mxu0 0
    %671 = vmatpush2.bf16.msra.mxu0 %v505
    %672 = vmatprep.subr.bf16.mxu0 0
    %673 = vmatpush2.bf16.msra.mxu0 %v504
    %674 = vmatprep.subr.bf16.mxu0 0
    %675 = vmatpush2.bf16.msra.mxu0 %v503
    %676 = vmatprep.subr.bf16.mxu0 0
    %677 = vmatpush2.bf16.msra.mxu0 %v502
    %678 = vmatprep.mubr.bf16.mxu0 %v209
    %679 = vmatmul.mubr.bf16.gmra.mxu0 %v208
    %v680 = vpop.f32.mrf.mxu0
    %v681 = vadd.f32 %v641, %v680
    %v682 = vpop.f32.mrf.mxu0
    %v683 = vpop.f32.mrf.mxu0
    %v684 = vpop.f32.mrf.mxu0
    %685 = vdwg.mxu0
    %686 = vmatprep.subr.bf16.mxu0 0
    %687 = vmatpush1.bf16.msra.mxu0 %v517
    %688 = vmatprep.subr.bf16.mxu0 0
    %689 = vmatpush1.bf16.msra.mxu0 %v516
    %690 = vmatprep.subr.bf16.mxu0 0
    %691 = vmatpush1.bf16.msra.mxu0 %v515
    %692 = vmatprep.subr.bf16.mxu0 0
    %693 = vmatpush1.bf16.msra.mxu0 %v514
    %694 = vmatprep.subr.bf16.mxu0 0
    %695 = vmatpush1.bf16.msra.mxu0 %v513
    %696 = vmatprep.subr.bf16.mxu0 0
    %697 = vmatpush1.bf16.msra.mxu0 %v512
    %698 = vmatprep.subr.bf16.mxu0 0
    %699 = vmatpush1.bf16.msra.mxu0 %v511
    %700 = vmatprep.subr.bf16.mxu0 0
    %701 = vmatpush1.bf16.msra.mxu0 %v510
    %702 = vmatprep.subr.bf16.mxu0 0
    %703 = vmatpush2.bf16.msra.mxu0 %v525
    %704 = vmatprep.subr.bf16.mxu0 0
    %705 = vmatpush2.bf16.msra.mxu0 %v524
    %706 = vmatprep.subr.bf16.mxu0 0
    %707 = vmatpush2.bf16.msra.mxu0 %v523
    %708 = vmatprep.subr.bf16.mxu0 0
    %709 = vmatpush2.bf16.msra.mxu0 %v522
    %710 = vmatprep.subr.bf16.mxu0 0
    %711 = vmatpush2.bf16.msra.mxu0 %v521
    %712 = vmatprep.subr.bf16.mxu0 0
    %713 = vmatpush2.bf16.msra.mxu0 %v520
    %714 = vmatprep.subr.bf16.mxu0 0
    %715 = vmatpush2.bf16.msra.mxu0 %v519
    %716 = vmatprep.subr.bf16.mxu0 0
    %717 = vmatpush2.bf16.msra.mxu0 %v518
    %718 = vmatprep.mubr.bf16.mxu0 %v211
    %719 = vmatmul.mubr.bf16.gmra.mxu0 %v210
    %v720 = vpop.f32.mrf.mxu0
    %v721 = vadd.f32 %v681, %v720
    %v722 = vpop.f32.mrf.mxu0
    %v723 = vpop.f32.mrf.mxu0
    %v724 = vpop.f32.mrf.mxu0
    %725 = vdwg.mxu0
    %726 = vmatprep.subr.bf16.mxu0 0
    %727 = vmatpush1.bf16.msra.mxu0 %v533
    %728 = vmatprep.subr.bf16.mxu0 0
    %729 = vmatpush1.bf16.msra.mxu0 %v532
    %730 = vmatprep.subr.bf16.mxu0 0
    %731 = vmatpush1.bf16.msra.mxu0 %v531
    %732 = vmatprep.subr.bf16.mxu0 0
    %733 = vmatpush1.bf16.msra.mxu0 %v530
    %734 = vmatprep.subr.bf16.mxu0 0
    %735 = vmatpush1.bf16.msra.mxu0 %v529
    %736 = vmatprep.subr.bf16.mxu0 0
    %737 = vmatpush1.bf16.msra.mxu0 %v528
    %738 = vmatprep.subr.bf16.mxu0 0
    %739 = vmatpush1.bf16.msra.mxu0 %v527
    %740 = vmatprep.subr.bf16.mxu0 0
    %741 = vmatpush1.bf16.msra.mxu0 %v526
    %742 = vmatprep.subr.bf16.mxu0 0
    %743 = vmatpush2.bf16.msra.mxu0 %v541
    %744 = vmatprep.subr.bf16.mxu0 0
    %745 = vmatpush2.bf16.msra.mxu0 %v540
    %746 = vmatprep.subr.bf16.mxu0 0
    %747 = vmatpush2.bf16.msra.mxu0 %v539
    %748 = vmatprep.subr.bf16.mxu0 0
    %749 = vmatpush2.bf16.msra.mxu0 %v538
    %750 = vmatprep.subr.bf16.mxu0 0
    %751 = vmatpush2.bf16.msra.mxu0 %v537
    %752 = vmatprep.subr.bf16.mxu0 0
    %753 = vmatpush2.bf16.msra.mxu0 %v536
    %754 = vmatprep.subr.bf16.mxu0 0
    %755 = vmatpush2.bf16.msra.mxu0 %v535
    %756 = vmatprep.subr.bf16.mxu0 0
    %757 = vmatpush2.bf16.msra.mxu0 %v534
    %758 = vmatprep.mubr.bf16.mxu0 %v213
    %759 = vmatmul.mubr.bf16.gmra.mxu0 %v212
    %v760 = vpop.f32.mrf.mxu0
    %v761 = vadd.f32 %v721, %v760
    %v762 = vpop.f32.mrf.mxu0
    %v763 = vpop.f32.mrf.mxu0
    %v764 = vpop.f32.mrf.mxu0
    %765 = vdwg.mxu0
    %v766 = vpack.c.bf16 %v761, %v761
    %v767 = vld [vmem:[%s3] sm:$0xff]
    %v768 = vld [vmem:[%s3 + $0x8] sm:$0xff]
    %v769 = vld [vmem:[%s3 + $0x10] sm:$0xff]
    %v770 = vld [vmem:[%s3 + $0x18] sm:$0xff]
    %v771 = vld [vmem:[%s3 + $0x20] sm:$0xff]
    %v772 = vld [vmem:[%s3 + $0x28] sm:$0xff]
    %v773 = vld [vmem:[%s3 + $0x30] sm:$0xff]
    %v774 = vld [vmem:[%s3 + $0x38] sm:$0xff]
    %v775 = vld [vmem:[%s3 + $0x40] sm:$0xff]
    %v776 = vld [vmem:[%s3 + $0x48] sm:$0xff]
    %v777 = vld [vmem:[%s3 + $0x50] sm:$0xff]
    %v778 = vld [vmem:[%s3 + $0x58] sm:$0xff]
    %v779 = vld [vmem:[%s3 + $0x60] sm:$0xff]
    %v780 = vld [vmem:[%s3 + $0x68] sm:$0xff]
    %v781 = vld [vmem:[%s3 + $0x70] sm:$0xff]
    %v782 = vld [vmem:[%s3 + $0x78] sm:$0xff]
    %v799 = vunpack.c.l.b16 %v767
    %v800 = vunpack.c.h.b16 %v767
    %v801 = vunpack.c.l.b16 %v768
    %v802 = vunpack.c.h.b16 %v768
    %v803 = vunpack.c.l.b16 %v769
    %v804 = vunpack.c.h.b16 %v769
    %v805 = vunpack.c.l.b16 %v770
    %v806 = vunpack.c.h.b16 %v770
    %v807 = vunpack.c.l.b16 %v771
    %v808 = vunpack.c.h.b16 %v771
    %v809 = vunpack.c.l.b16 %v772
    %v810 = vunpack.c.h.b16 %v772
    %v811 = vunpack.c.l.b16 %v773
    %v812 = vunpack.c.h.b16 %v773
    %v813 = vunpack.c.l.b16 %v774
    %v814 = vunpack.c.h.b16 %v774
    %v815 = vunpack.c.l.b16 %v775
    %v816 = vunpack.c.h.b16 %v775
    %v817 = vunpack.c.l.b16 %v776
    %v818 = vunpack.c.h.b16 %v776
    %v819 = vunpack.c.l.b16 %v777
    %v820 = vunpack.c.h.b16 %v777
    %v821 = vunpack.c.l.b16 %v778
    %v822 = vunpack.c.h.b16 %v778
    %v823 = vunpack.c.l.b16 %v779
    %v824 = vunpack.c.h.b16 %v779
    %v825 = vunpack.c.l.b16 %v780
    %v826 = vunpack.c.h.b16 %v780
    %v827 = vunpack.c.l.b16 %v781
    %v828 = vunpack.c.h.b16 %v781
    %v829 = vunpack.c.l.b16 %v782
    %v830 = vunpack.c.h.b16 %v782
    %v831 = vpack.c.b16 %v803, %v799
    %v832 = vpack.c.b16 %v804, %v800
    %v833 = vpack.c.b16 %v805, %v801
    %v834 = vpack.c.b16 %v806, %v802
    %v835 = vpack.c.b16 %v811, %v807
    %v836 = vpack.c.b16 %v812, %v808
    %v837 = vpack.c.b16 %v813, %v809
    %v838 = vpack.c.b16 %v814, %v810
    %v839 = vpack.c.b16 %v819, %v815
    %v840 = vpack.c.b16 %v820, %v816
    %v841 = vpack.c.b16 %v821, %v817
    %v842 = vpack.c.b16 %v822, %v818
    %v843 = vpack.c.b16 %v827, %v823
    %v844 = vpack.c.b16 %v828, %v824
    %v845 = vpack.c.b16 %v829, %v825
    %v846 = vpack.c.b16 %v830, %v826
    %vm863 = vcmask 523264
    %v865 = vsel %vm863, %v766, 0
    %867 = vmatprep.subr.bf16.mxu0 0
    %868 = vmatpush1.bf16.msra.mxu0 0
    %869 = vmatprep.subr.bf16.mxu0 0
    %870 = vmatpush1.bf16.msra.mxu0 0
    %871 = vmatprep.subr.bf16.mxu0 0
    %872 = vmatpush1.bf16.msra.mxu0 0
    %873 = vmatprep.subr.bf16.mxu0 0
    %874 = vmatpush1.bf16.msra.mxu0 0
    %875 = vmatprep.subr.bf16.mxu0 %v844
    %876 = vmatpush1.bf16.msra.mxu0 %v843
    %877 = vmatprep.subr.bf16.mxu0 %v840
    %878 = vmatpush1.bf16.msra.mxu0 %v839
    %879 = vmatprep.subr.bf16.mxu0 %v836
    %880 = vmatpush1.bf16.msra.mxu0 %v835
    %881 = vmatprep.subr.bf16.mxu0 %v832
    %882 = vmatpush1.bf16.msra.mxu0 %v831
    %883 = vmatprep.subr.bf16.mxu0 0
    %884 = vmatpush2.bf16.msra.mxu0 0
    %885 = vmatprep.subr.bf16.mxu0 0
    %886 = vmatpush2.bf16.msra.mxu0 0
    %887 = vmatprep.subr.bf16.mxu0 0
    %888 = vmatpush2.bf16.msra.mxu0 0
    %889 = vmatprep.subr.bf16.mxu0 0
    %890 = vmatpush2.bf16.msra.mxu0 0
    %891 = vmatprep.subr.bf16.mxu0 0
    %892 = vmatpush2.bf16.msra.mxu0 0
    %893 = vmatprep.subr.bf16.mxu0 0
    %894 = vmatpush2.bf16.msra.mxu0 0
    %895 = vmatprep.subr.bf16.mxu0 0
    %896 = vmatpush2.bf16.msra.mxu0 0
    %897 = vmatprep.subr.bf16.mxu0 0
    %898 = vmatpush2.bf16.msra.mxu0 0
    %899 = vmatprep.mubr.bf16.mxu0 0
    %900 = vmatmul.mubr.bf16.gmra.mxu0 %v865
    %v901 = vpop.f32.mrf.mxu0
    %v902 = vadd.f32 0.0, %v901
    %v903 = vpop.f32.mrf.mxu0
    %v904 = vadd.f32 0.0, %v903
    %v905 = vpop.f32.mrf.mxu0
    %v906 = vpop.f32.mrf.mxu0
    %907 = vdwg.mxu0
    %908 = vmatprep.subr.bf16.mxu0 0
    %909 = vmatpush1.bf16.msra.mxu0 0
    %910 = vmatprep.subr.bf16.mxu0 0
    %911 = vmatpush1.bf16.msra.mxu0 0
    %912 = vmatprep.subr.bf16.mxu0 0
    %913 = vmatpush1.bf16.msra.mxu0 0
    %914 = vmatprep.subr.bf16.mxu0 0
    %915 = vmatpush1.bf16.msra.mxu0 0
    %916 = vmatprep.subr.bf16.mxu0 %v846
    %917 = vmatpush1.bf16.msra.mxu0 %v845
    %918 = vmatprep.subr.bf16.mxu0 %v842
    %919 = vmatpush1.bf16.msra.mxu0 %v841
    %920 = vmatprep.subr.bf16.mxu0 %v838
    %921 = vmatpush1.bf16.msra.mxu0 %v837
    %922 = vmatprep.subr.bf16.mxu0 %v834
    %923 = vmatpush1.bf16.msra.mxu0 %v833
    %924 = vmatprep.subr.bf16.mxu0 0
    %925 = vmatpush2.bf16.msra.mxu0 0
    %926 = vmatprep.subr.bf16.mxu0 0
    %927 = vmatpush2.bf16.msra.mxu0 0
    %928 = vmatprep.subr.bf16.mxu0 0
    %929 = vmatpush2.bf16.msra.mxu0 0
    %930 = vmatprep.subr.bf16.mxu0 0
    %931 = vmatpush2.bf16.msra.mxu0 0
    %932 = vmatprep.subr.bf16.mxu0 0
    %933 = vmatpush2.bf16.msra.mxu0 0
    %934 = vmatprep.subr.bf16.mxu0 0
    %935 = vmatpush2.bf16.msra.mxu0 0
    %936 = vmatprep.subr.bf16.mxu0 0
    %937 = vmatpush2.bf16.msra.mxu0 0
    %938 = vmatprep.subr.bf16.mxu0 0
    %939 = vmatpush2.bf16.msra.mxu0 0
    %940 = vmatprep.mubr.bf16.mxu0 0
    %941 = vmatmul.mubr.bf16.gmra.mxu0 %v865
    %v942 = vpop.f32.mrf.mxu0
    %v943 = vadd.f32 0.0, %v942
    %v944 = vpop.f32.mrf.mxu0
    %v945 = vadd.f32 0.0, %v944
    %v946 = vpop.f32.mrf.mxu0
    %v947 = vpop.f32.mrf.mxu0
    %948 = vdwg.mxu0
    %v949 = vld [vmem:[%s6] sm:$0x1]
    %v950 = vld [vmem:[%s8] sm:$0xf]
    %v951 = vpack.c.bf16 %v902, %v902
    %v952 = vpack.c.bf16 %v904, %v904
    %v953 = vpack.c.bf16 %v943, %v943
    %v954 = vpack.c.bf16 %v945, %v945
    %v955 = vld [vmem:[%s5] sm:$0xf]
    %v956 = vld [vmem:[%s5 + $0x4] sm:$0xf]
    %v957 = vld [vmem:[%s5 + $0x8] sm:$0xf]
    %v958 = vld [vmem:[%s5 + $0xc] sm:$0xf]
    %v959 = vld [vmem:[%s5 + $0x10] sm:$0xf]
    %v960 = vld [vmem:[%s5 + $0x14] sm:$0xf]
    %v961 = vld [vmem:[%s5 + $0x18] sm:$0xf]
    %v962 = vld [vmem:[%s5 + $0x1c] sm:$0xf]
    %v963 = vld [vmem:[%s5 + $0x20] sm:$0xf]
    %v964 = vld [vmem:[%s5 + $0x24] sm:$0xf]
    %v965 = vld [vmem:[%s5 + $0x28] sm:$0xf]
    %v966 = vld [vmem:[%s5 + $0x2c] sm:$0xf]
    %v967 = vld [vmem:[%s5 + $0x30] sm:$0xf]
    %v968 = vld [vmem:[%s5 + $0x34] sm:$0xf]
    %v969 = vld [vmem:[%s5 + $0x38] sm:$0xf]
    %v970 = vld [vmem:[%s5 + $0x3c] sm:$0xf]
    %v971 = vld [vmem:[%s5 + $0x40] sm:$0xf]
    %v972 = vld [vmem:[%s5 + $0x44] sm:$0xf]
    %v973 = vld [vmem:[%s5 + $0x48] sm:$0xf]
    %v974 = vld [vmem:[%s5 + $0x4c] sm:$0xf]
    %v975 = vld [vmem:[%s5 + $0x50] sm:$0xf]
    %v976 = vld [vmem:[%s5 + $0x54] sm:$0xf]
    %v977 = vld [vmem:[%s5 + $0x58] sm:$0xf]
    %v978 = vld [vmem:[%s5 + $0x5c] sm:$0xf]
    %v979 = vld [vmem:[%s5 + $0x60] sm:$0xf]
    %v980 = vld [vmem:[%s5 + $0x64] sm:$0xf]
    %v981 = vld [vmem:[%s5 + $0x68] sm:$0xf]
    %v982 = vld [vmem:[%s5 + $0x6c] sm:$0xf]
    %v983 = vld [vmem:[%s5 + $0x70] sm:$0xf]
    %v984 = vld [vmem:[%s5 + $0x74] sm:$0xf]
    %v985 = vld [vmem:[%s5 + $0x78] sm:$0xf]
    %v986 = vld [vmem:[%s5 + $0x7c] sm:$0xf]
    %v987 = vld [vmem:[%s5 + $0x80] sm:$0xf]
    %v988 = vld [vmem:[%s5 + $0x84] sm:$0xf]
    %v989 = vld [vmem:[%s5 + $0x88] sm:$0xf]
    %v990 = vld [vmem:[%s5 + $0x8c] sm:$0xf]
    %v991 = vld [vmem:[%s5 + $0x90] sm:$0xf]
    %v992 = vld [vmem:[%s5 + $0x94] sm:$0xf]
    %v993 = vld [vmem:[%s5 + $0x98] sm:$0xf]
    %v994 = vld [vmem:[%s5 + $0x9c] sm:$0xf]
    %v995 = vld [vmem:[%s5 + $0xa0] sm:$0xf]
    %v996 = vld [vmem:[%s5 + $0xa4] sm:$0xf]
    %v997 = vld [vmem:[%s5 + $0xa8] sm:$0xf]
    %v998 = vld [vmem:[%s5 + $0xac] sm:$0xf]
    %v999 = vld [vmem:[%s5 + $0xb0] sm:$0xf]
    %v1000 = vld [vmem:[%s5 + $0xb4] sm:$0xf]
    %v1001 = vld [vmem:[%s5 + $0xb8] sm:$0xf]
    %v1002 = vld [vmem:[%s5 + $0xbc] sm:$0xf]
    %v1003 = vld [vmem:[%s5 + $0xc0] sm:$0xf]
    %v1004 = vld [vmem:[%s5 + $0xc4] sm:$0xf]
    %v1005 = vld [vmem:[%s5 + $0xc8] sm:$0xf]
    %v1006 = vld [vmem:[%s5 + $0xcc] sm:$0xf]
    %v1007 = vld [vmem:[%s5 + $0xd0] sm:$0xf]
    %v1008 = vld [vmem:[%s5 + $0xd4] sm:$0xf]
    %v1009 = vld [vmem:[%s5 + $0xd8] sm:$0xf]
    %v1010 = vld [vmem:[%s5 + $0xdc] sm:$0xf]
    %v1011 = vld [vmem:[%s5 + $0xe0] sm:$0xf]
    %v1012 = vld [vmem:[%s5 + $0xe4] sm:$0xf]
    %v1013 = vld [vmem:[%s5 + $0xe8] sm:$0xf]
    %v1014 = vld [vmem:[%s5 + $0xec] sm:$0xf]
    %v1015 = vld [vmem:[%s5 + $0xf0] sm:$0xf]
    %v1016 = vld [vmem:[%s5 + $0xf4] sm:$0xf]
    %v1017 = vld [vmem:[%s5 + $0xf8] sm:$0xf]
    %v1018 = vld [vmem:[%s5 + $0xfc] sm:$0xf]
    %v1020 = vlaneseq
    %v1021 = vshrl.u32 %v1020, 7
    %v1022 = vsub.s32 0, %v1021
    %v1023 = vrot.slane %v949, %v1022
    %v1089 = vunpack.c.l.b16 %v955
    %v1090 = vunpack.c.l.b16 %v956
    %v1091 = vunpack.c.l.b16 %v957
    %v1092 = vunpack.c.l.b16 %v958
    %v1093 = vunpack.c.l.b16 %v959
    %v1094 = vunpack.c.l.b16 %v960
    %v1095 = vunpack.c.l.b16 %v961
    %v1096 = vunpack.c.l.b16 %v962
    %v1097 = vunpack.c.l.b16 %v963
    %v1098 = vunpack.c.l.b16 %v964
    %v1099 = vunpack.c.l.b16 %v965
    %v1100 = vunpack.c.l.b16 %v966
    %v1101 = vunpack.c.l.b16 %v967
    %v1102 = vunpack.c.l.b16 %v968
    %v1103 = vunpack.c.l.b16 %v969
    %v1104 = vunpack.c.l.b16 %v970
    %v1105 = vunpack.c.l.b16 %v971
    %v1106 = vunpack.c.l.b16 %v972
    %v1107 = vunpack.c.l.b16 %v973
    %v1108 = vunpack.c.l.b16 %v974
    %v1109 = vunpack.c.l.b16 %v975
    %v1110 = vunpack.c.l.b16 %v976
    %v1111 = vunpack.c.l.b16 %v977
    %v1112 = vunpack.c.l.b16 %v978
    %v1113 = vunpack.c.l.b16 %v979
    %v1114 = vunpack.c.l.b16 %v980
    %v1115 = vunpack.c.l.b16 %v981
    %v1116 = vunpack.c.l.b16 %v982
    %v1117 = vunpack.c.l.b16 %v983
    %v1118 = vunpack.c.l.b16 %v984
    %v1119 = vunpack.c.l.b16 %v985
    %v1120 = vunpack.c.l.b16 %v986
    %v1121 = vunpack.c.l.b16 %v987
    %v1122 = vunpack.c.l.b16 %v988
    %v1123 = vunpack.c.l.b16 %v989
    %v1124 = vunpack.c.l.b16 %v990
    %v1125 = vunpack.c.l.b16 %v991
    %v1126 = vunpack.c.l.b16 %v992
    %v1127 = vunpack.c.l.b16 %v993
    %v1128 = vunpack.c.l.b16 %v994
    %v1129 = vunpack.c.l.b16 %v995
    %v1130 = vunpack.c.l.b16 %v996
    %v1131 = vunpack.c.l.b16 %v997
    %v1132 = vunpack.c.l.b16 %v998
    %v1133 = vunpack.c.l.b16 %v999
    %v1134 = vunpack.c.l.b16 %v1000
    %v1135 = vunpack.c.l.b16 %v1001
    %v1136 = vunpack.c.l.b16 %v1002
    %v1137 = vunpack.c.l.b16 %v1003
    %v1138 = vunpack.c.l.b16 %v1004
    %v1139 = vunpack.c.l.b16 %v1005
    %v1140 = vunpack.c.l.b16 %v1006
    %v1141 = vunpack.c.l.b16 %v1007
    %v1142 = vunpack.c.l.b16 %v1008
    %v1143 = vunpack.c.l.b16 %v1009
    %v1144 = vunpack.c.l.b16 %v1010
    %v1145 = vunpack.c.l.b16 %v1011
    %v1146 = vunpack.c.l.b16 %v1012
    %v1147 = vunpack.c.l.b16 %v1013
    %v1148 = vunpack.c.l.b16 %v1014
    %v1149 = vunpack.c.l.b16 %v1015
    %v1150 = vunpack.c.l.b16 %v1016
    %v1151 = vunpack.c.l.b16 %v1017
    %v1152 = vunpack.c.l.b16 %v1018
    %v1153 = vpack.c.b16 %v1090, %v1089
    %v1154 = vpack.c.b16 %v1092, %v1091
    %v1155 = vpack.c.b16 %v1094, %v1093
    %v1156 = vpack.c.b16 %v1096, %v1095
    %v1157 = vpack.c.b16 %v1098, %v1097
    %v1158 = vpack.c.b16 %v1100, %v1099
    %v1159 = vpack.c.b16 %v1102, %v1101
    %v1160 = vpack.c.b16 %v1104, %v1103
    %v1161 = vpack.c.b16 %v1106, %v1105
    %v1162 = vpack.c.b16 %v1108, %v1107
    %v1163 = vpack.c.b16 %v1110, %v1109
    %v1164 = vpack.c.b16 %v1112, %v1111
    %v1165 = vpack.c.b16 %v1114, %v1113
    %v1166 = vpack.c.b16 %v1116, %v1115
    %v1167 = vpack.c.b16 %v1118, %v1117
    %v1168 = vpack.c.b16 %v1120, %v1119
    %v1169 = vpack.c.b16 %v1122, %v1121
    %v1170 = vpack.c.b16 %v1124, %v1123
    %v1171 = vpack.c.b16 %v1126, %v1125
    %v1172 = vpack.c.b16 %v1128, %v1127
    %v1173 = vpack.c.b16 %v1130, %v1129
    %v1174 = vpack.c.b16 %v1132, %v1131
    %v1175 = vpack.c.b16 %v1134, %v1133
    %v1176 = vpack.c.b16 %v1136, %v1135
    %v1177 = vpack.c.b16 %v1138, %v1137
    %v1178 = vpack.c.b16 %v1140, %v1139
    %v1179 = vpack.c.b16 %v1142, %v1141
    %v1180 = vpack.c.b16 %v1144, %v1143
    %v1181 = vpack.c.b16 %v1146, %v1145
    %v1182 = vpack.c.b16 %v1148, %v1147
    %v1183 = vpack.c.b16 %v1150, %v1149
    %v1184 = vpack.c.b16 %v1152, %v1151
    %1217 = vmatprep.subr.bf16.mxu0 0
    %1218 = vmatpush1.bf16.msra.mxu0 %v1160
    %1219 = vmatprep.subr.bf16.mxu0 0
    %1220 = vmatpush1.bf16.msra.mxu0 %v1159
    %1221 = vmatprep.subr.bf16.mxu0 0
    %1222 = vmatpush1.bf16.msra.mxu0 %v1158
    %1223 = vmatprep.subr.bf16.mxu0 0
    %1224 = vmatpush1.bf16.msra.mxu0 %v1157
    %1225 = vmatprep.subr.bf16.mxu0 0
    %1226 = vmatpush1.bf16.msra.mxu0 %v1156
    %1227 = vmatprep.subr.bf16.mxu0 0
    %1228 = vmatpush1.bf16.msra.mxu0 %v1155
    %1229 = vmatprep.subr.bf16.mxu0 0
    %1230 = vmatpush1.bf16.msra.mxu0 %v1154
    %1231 = vmatprep.subr.bf16.mxu0 0
    %1232 = vmatpush1.bf16.msra.mxu0 %v1153
    %1233 = vmatprep.subr.bf16.mxu0 0
    %1234 = vmatpush2.bf16.msra.mxu0 %v1168
    %1235 = vmatprep.subr.bf16.mxu0 0
    %1236 = vmatpush2.bf16.msra.mxu0 %v1167
    %1237 = vmatprep.subr.bf16.mxu0 0
    %1238 = vmatpush2.bf16.msra.mxu0 %v1166
    %1239 = vmatprep.subr.bf16.mxu0 0
    %1240 = vmatpush2.bf16.msra.mxu0 %v1165
    %1241 = vmatprep.subr.bf16.mxu0 0
    %1242 = vmatpush2.bf16.msra.mxu0 %v1164
    %1243 = vmatprep.subr.bf16.mxu0 0
    %1244 = vmatpush2.bf16.msra.mxu0 %v1163
    %1245 = vmatprep.subr.bf16.mxu0 0
    %1246 = vmatpush2.bf16.msra.mxu0 %v1162
    %1247 = vmatprep.subr.bf16.mxu0 0
    %1248 = vmatpush2.bf16.msra.mxu0 %v1161
    %1249 = vmatprep.mubr.bf16.mxu0 %v952
    %1250 = vmatmul.mubr.bf16.gmra.mxu0 %v951
    %v1251 = vpop.f32.mrf.mxu0
    %v1252 = vadd.f32 %v1023, %v1251
    %v1253 = vpop.f32.mrf.mxu0
    %v1254 = vpop.f32.mrf.mxu0
    %v1255 = vpop.f32.mrf.mxu0
    %1256 = vdwg.mxu0
    %1257 = vmatprep.subr.bf16.mxu0 0
    %1258 = vmatpush1.bf16.msra.mxu0 %v1176
    %1259 = vmatprep.subr.bf16.mxu0 0
    %1260 = vmatpush1.bf16.msra.mxu0 %v1175
    %1261 = vmatprep.subr.bf16.mxu0 0
    %1262 = vmatpush1.bf16.msra.mxu0 %v1174
    %1263 = vmatprep.subr.bf16.mxu0 0
    %1264 = vmatpush1.bf16.msra.mxu0 %v1173
    %1265 = vmatprep.subr.bf16.mxu0 0
    %1266 = vmatpush1.bf16.msra.mxu0 %v1172
    %1267 = vmatprep.subr.bf16.mxu0 0
    %1268 = vmatpush1.bf16.msra.mxu0 %v1171
    %1269 = vmatprep.subr.bf16.mxu0 0
    %1270 = vmatpush1.bf16.msra.mxu0 %v1170
    %1271 = vmatprep.subr.bf16.mxu0 0
    %1272 = vmatpush1.bf16.msra.mxu0 %v1169
    %1273 = vmatprep.subr.bf16.mxu0 0
    %1274 = vmatpush2.bf16.msra.mxu0 %v1184
    %1275 = vmatprep.subr.bf16.mxu0 0
    %1276 = vmatpush2.bf16.msra.mxu0 %v1183
    %1277 = vmatprep.subr.bf16.mxu0 0
    %1278 = vmatpush2.bf16.msra.mxu0 %v1182
    %1279 = vmatprep.subr.bf16.mxu0 0
    %1280 = vmatpush2.bf16.msra.mxu0 %v1181
    %1281 = vmatprep.subr.bf16.mxu0 0
    %1282 = vmatpush2.bf16.msra.mxu0 %v1180
    %1283 = vmatprep.subr.bf16.mxu0 0
    %1284 = vmatpush2.bf16.msra.mxu0 %v1179
    %1285 = vmatprep.subr.bf16.mxu0 0
    %1286 = vmatpush2.bf16.msra.mxu0 %v1178
    %1287 = vmatprep.subr.bf16.mxu0 0
    %1288 = vmatpush2.bf16.msra.mxu0 %v1177
    %1289 = vmatprep.mubr.bf16.mxu0 %v954
    %1290 = vmatmul.mubr.bf16.gmra.mxu0 %v953
    %v1291 = vpop.f32.mrf.mxu0
    %v1292 = vadd.f32 %v1252, %v1291
    %v1293 = vpop.f32.mrf.mxu0
    %v1294 = vpop.f32.mrf.mxu0
    %v1295 = vpop.f32.mrf.mxu0
    %1296 = vdwg.mxu0
    %v1297 = vmax.f32 %v1292, 0.0
    %v1298 = vpack.c.bf16 %v1297, %v1297
    %v1299 = vld [vmem:[%s7] sm:$0xff]
    %v1300 = vld [vmem:[%s7 + $0x8] sm:$0xff]
    %v1301 = vld [vmem:[%s7 + $0x10] sm:$0xff]
    %v1302 = vld [vmem:[%s7 + $0x18] sm:$0xff]
    %v1303 = vld [vmem:[%s7 + $0x20] sm:$0xff]
    %v1304 = vld [vmem:[%s7 + $0x28] sm:$0xff]
    %v1305 = vld [vmem:[%s7 + $0x30] sm:$0xff]
    %v1306 = vld [vmem:[%s7 + $0x38] sm:$0xff]
    %v1307 = vld [vmem:[%s7 + $0x40] sm:$0xff]
    %v1308 = vld [vmem:[%s7 + $0x48] sm:$0xff]
    %v1309 = vld [vmem:[%s7 + $0x50] sm:$0xff]
    %v1310 = vld [vmem:[%s7 + $0x58] sm:$0xff]
    %v1311 = vld [vmem:[%s7 + $0x60] sm:$0xff]
    %v1312 = vld [vmem:[%s7 + $0x68] sm:$0xff]
    %v1313 = vld [vmem:[%s7 + $0x70] sm:$0xff]
    %v1314 = vld [vmem:[%s7 + $0x78] sm:$0xff]
    %v1315 = vld [vmem:[%s7 + $0x80] sm:$0xff]
    %v1316 = vld [vmem:[%s7 + $0x88] sm:$0xff]
    %v1317 = vld [vmem:[%s7 + $0x90] sm:$0xff]
    %v1318 = vld [vmem:[%s7 + $0x98] sm:$0xff]
    %v1319 = vld [vmem:[%s7 + $0xa0] sm:$0xff]
    %v1320 = vld [vmem:[%s7 + $0xa8] sm:$0xff]
    %v1321 = vld [vmem:[%s7 + $0xb0] sm:$0xff]
    %v1322 = vld [vmem:[%s7 + $0xb8] sm:$0xff]
    %v1323 = vld [vmem:[%s7 + $0xc0] sm:$0xff]
    %v1324 = vld [vmem:[%s7 + $0xc8] sm:$0xff]
    %v1325 = vld [vmem:[%s7 + $0xd0] sm:$0xff]
    %v1326 = vld [vmem:[%s7 + $0xd8] sm:$0xff]
    %v1327 = vld [vmem:[%s7 + $0xe0] sm:$0xff]
    %v1328 = vld [vmem:[%s7 + $0xe8] sm:$0xff]
    %v1329 = vld [vmem:[%s7 + $0xf0] sm:$0xff]
    %v1330 = vld [vmem:[%s7 + $0xf8] sm:$0xff]
    %v1332 = vlaneseq
    %v1333 = vshrl.u32 %v1332, 7
    %v1334 = vsub.s32 0, %v1333
    %v1335 = vrot.slane %v950, %v1334
    %v1336 = vlaneseq
    %v1337 = vshrl.u32 %v1336, 7
    %v1338 = vsub.s32 1, %v1337
    %v1339 = vrot.slane %v950, %v1338
    %v1340 = vlaneseq
    %v1341 = vshrl.u32 %v1340, 7
    %v1342 = vsub.s32 2, %v1341
    %v1343 = vrot.slane %v950, %v1342
    %v1344 = vlaneseq
    %v1345 = vshrl.u32 %v1344, 7
    %v1346 = vsub.s32 3, %v1345
    %v1347 = vrot.slane %v950, %v1346
    %v1384 = vunpack.c.l.b16 %v1299
    %v1385 = vunpack.c.h.b16 %v1299
    %v1386 = vunpack.c.l.b16 %v1300
    %v1387 = vunpack.c.h.b16 %v1300
    %v1388 = vunpack.c.l.b16 %v1301
    %v1389 = vunpack.c.h.b16 %v1301
    %v1390 = vunpack.c.l.b16 %v1302
    %v1391 = vunpack.c.h.b16 %v1302
    %v1392 = vunpack.c.l.b16 %v1303
    %v1393 = vunpack.c.h.b16 %v1303
    %v1394 = vunpack.c.l.b16 %v1304
    %v1395 = vunpack.c.h.b16 %v1304
    %v1396 = vunpack.c.l.b16 %v1305
    %v1397 = vunpack.c.h.b16 %v1305
    %v1398 = vunpack.c.l.b16 %v1306
    %v1399 = vunpack.c.h.b16 %v1306
    %v1400 = vunpack.c.l.b16 %v1307
    %v1401 = vunpack.c.h.b16 %v1307
    %v1402 = vunpack.c.l.b16 %v1308
    %v1403 = vunpack.c.h.b16 %v1308
    %v1404 = vunpack.c.l.b16 %v1309
    %v1405 = vunpack.c.h.b16 %v1309
    %v1406 = vunpack.c.l.b16 %v1310
    %v1407 = vunpack.c.h.b16 %v1310
    %v1408 = vunpack.c.l.b16 %v1311
    %v1409 = vunpack.c.h.b16 %v1311
    %v1410 = vunpack.c.l.b16 %v1312
    %v1411 = vunpack.c.h.b16 %v1312
    %v1412 = vunpack.c.l.b16 %v1313
    %v1413 = vunpack.c.h.b16 %v1313
    %v1414 = vunpack.c.l.b16 %v1314
    %v1415 = vunpack.c.h.b16 %v1314
    %v1416 = vunpack.c.l.b16 %v1315
    %v1417 = vunpack.c.h.b16 %v1315
    %v1418 = vunpack.c.l.b16 %v1316
    %v1419 = vunpack.c.h.b16 %v1316
    %v1420 = vunpack.c.l.b16 %v1317
    %v1421 = vunpack.c.h.b16 %v1317
    %v1422 = vunpack.c.l.b16 %v1318
    %v1423 = vunpack.c.h.b16 %v1318
    %v1424 = vunpack.c.l.b16 %v1319
    %v1425 = vunpack.c.h.b16 %v1319
    %v1426 = vunpack.c.l.b16 %v1320
    %v1427 = vunpack.c.h.b16 %v1320
    %v1428 = vunpack.c.l.b16 %v1321
    %v1429 = vunpack.c.h.b16 %v1321
    %v1430 = vunpack.c.l.b16 %v1322
    %v1431 = vunpack.c.h.b16 %v1322
    %v1432 = vunpack.c.l.b16 %v1323
    %v1433 = vunpack.c.h.b16 %v1323
    %v1434 = vunpack.c.l.b16 %v1324
    %v1435 = vunpack.c.h.b16 %v1324
    %v1436 = vunpack.c.l.b16 %v1325
    %v1437 = vunpack.c.h.b16 %v1325
    %v1438 = vunpack.c.l.b16 %v1326
    %v1439 = vunpack.c.h.b16 %v1326
    %v1440 = vunpack.c.l.b16 %v1327
    %v1441 = vunpack.c.h.b16 %v1327
    %v1442 = vunpack.c.l.b16 %v1328
    %v1443 = vunpack.c.h.b16 %v1328
    %v1444 = vunpack.c.l.b16 %v1329
    %v1445 = vunpack.c.h.b16 %v1329
    %v1446 = vunpack.c.l.b16 %v1330
    %v1447 = vunpack.c.h.b16 %v1330
    %v1448 = vpack.c.b16 %v1388, %v1384
    %v1449 = vpack.c.b16 %v1389, %v1385
    %v1450 = vpack.c.b16 %v1390, %v1386
    %v1451 = vpack.c.b16 %v1391, %v1387
    %v1452 = vpack.c.b16 %v1396, %v1392
    %v1453 = vpack.c.b16 %v1397, %v1393
    %v1454 = vpack.c.b16 %v1398, %v1394
    %v1455 = vpack.c.b16 %v1399, %v1395
    %v1456 = vpack.c.b16 %v1404, %v1400
    %v1457 = vpack.c.b16 %v1405, %v1401
    %v1458 = vpack.c.b16 %v1406, %v1402
    %v1459 = vpack.c.b16 %v1407, %v1403
    %v1460 = vpack.c.b16 %v1412, %v1408
    %v1461 = vpack.c.b16 %v1413, %v1409
    %v1462 = vpack.c.b16 %v1414, %v1410
    %v1463 = vpack.c.b16 %v1415, %v1411
    %v1464 = vpack.c.b16 %v1420, %v1416
    %v1465 = vpack.c.b16 %v1421, %v1417
    %v1466 = vpack.c.b16 %v1422, %v1418
    %v1467 = vpack.c.b16 %v1423, %v1419
    %v1468 = vpack.c.b16 %v1428, %v1424
    %v1469 = vpack.c.b16 %v1429, %v1425
    %v1470 = vpack.c.b16 %v1430, %v1426
    %v1471 = vpack.c.b16 %v1431, %v1427
    %v1472 = vpack.c.b16 %v1436, %v1432
    %v1473 = vpack.c.b16 %v1437, %v1433
    %v1474 = vpack.c.b16 %v1438, %v1434
    %v1475 = vpack.c.b16 %v1439, %v1435
    %v1476 = vpack.c.b16 %v1444, %v1440
    %v1477 = vpack.c.b16 %v1445, %v1441
    %v1478 = vpack.c.b16 %v1446, %v1442
    %v1479 = vpack.c.b16 %v1447, %v1443
    %1512 = vmatprep.subr.bf16.mxu0 %v1477
    %1513 = vmatpush1.bf16.msra.mxu0 %v1476
    %1514 = vmatprep.subr.bf16.mxu0 %v1473
    %1515 = vmatpush1.bf16.msra.mxu0 %v1472
    %1516 = vmatprep.subr.bf16.mxu0 %v1469
    %1517 = vmatpush1.bf16.msra.mxu0 %v1468
    %1518 = vmatprep.subr.bf16.mxu0 %v1465
    %1519 = vmatpush1.bf16.msra.mxu0 %v1464
    %1520 = vmatprep.subr.bf16.mxu0 %v1461
    %1521 = vmatpush1.bf16.msra.mxu0 %v1460
    %1522 = vmatprep.subr.bf16.mxu0 %v1457
    %1523 = vmatpush1.bf16.msra.mxu0 %v1456
    %1524 = vmatprep.subr.bf16.mxu0 %v1453
    %1525 = vmatpush1.bf16.msra.mxu0 %v1452
    %1526 = vmatprep.subr.bf16.mxu0 %v1449
    %1527 = vmatpush1.bf16.msra.mxu0 %v1448
    %1528 = vmatprep.subr.bf16.mxu0 0
    %1529 = vmatpush2.bf16.msra.mxu0 0
    %1530 = vmatprep.subr.bf16.mxu0 0
    %1531 = vmatpush2.bf16.msra.mxu0 0
    %1532 = vmatprep.subr.bf16.mxu0 0
    %1533 = vmatpush2.bf16.msra.mxu0 0
    %1534 = vmatprep.subr.bf16.mxu0 0
    %1535 = vmatpush2.bf16.msra.mxu0 0
    %1536 = vmatprep.subr.bf16.mxu0 0
    %1537 = vmatpush2.bf16.msra.mxu0 0
    %1538 = vmatprep.subr.bf16.mxu0 0
    %1539 = vmatpush2.bf16.msra.mxu0 0
    %1540 = vmatprep.subr.bf16.mxu0 0
    %1541 = vmatpush2.bf16.msra.mxu0 0
    %1542 = vmatprep.subr.bf16.mxu0 0
    %1543 = vmatpush2.bf16.msra.mxu0 0
    %1544 = vmatprep.mubr.bf16.mxu0 0
    %1545 = vmatmul.mubr.bf16.gmra.mxu0 %v1298
    %v1546 = vpop.f32.mrf.mxu0
    %v1547 = vadd.f32 %v1335, %v1546
    %v1548 = vpop.f32.mrf.mxu0
    %v1549 = vadd.f32 %v1339, %v1548
    %v1550 = vpop.f32.mrf.mxu0
    %v1551 = vpop.f32.mrf.mxu0
    %1552 = vdwg.mxu0
    %1553 = vmatprep.subr.bf16.mxu0 %v1479
    %1554 = vmatpush1.bf16.msra.mxu0 %v1478
    %1555 = vmatprep.subr.bf16.mxu0 %v1475
    %1556 = vmatpush1.bf16.msra.mxu0 %v1474
    %1557 = vmatprep.subr.bf16.mxu0 %v1471
    %1558 = vmatpush1.bf16.msra.mxu0 %v1470
    %1559 = vmatprep.subr.bf16.mxu0 %v1467
    %1560 = vmatpush1.bf16.msra.mxu0 %v1466
    %1561 = vmatprep.subr.bf16.mxu0 %v1463
    %1562 = vmatpush1.bf16.msra.mxu0 %v1462
    %1563 = vmatprep.subr.bf16.mxu0 %v1459
    %1564 = vmatpush1.bf16.msra.mxu0 %v1458
    %1565 = vmatprep.subr.bf16.mxu0 %v1455
    %1566 = vmatpush1.bf16.msra.mxu0 %v1454
    %1567 = vmatprep.subr.bf16.mxu0 %v1451
    %1568 = vmatpush1.bf16.msra.mxu0 %v1450
    %1569 = vmatprep.subr.bf16.mxu0 0
    %1570 = vmatpush2.bf16.msra.mxu0 0
    %1571 = vmatprep.subr.bf16.mxu0 0
    %1572 = vmatpush2.bf16.msra.mxu0 0
    %1573 = vmatprep.subr.bf16.mxu0 0
    %1574 = vmatpush2.bf16.msra.mxu0 0
    %1575 = vmatprep.subr.bf16.mxu0 0
    %1576 = vmatpush2.bf16.msra.mxu0 0
    %1577 = vmatprep.subr.bf16.mxu0 0
    %1578 = vmatpush2.bf16.msra.mxu0 0
    %1579 = vmatprep.subr.bf16.mxu0 0
    %1580 = vmatpush2.bf16.msra.mxu0 0
    %1581 = vmatprep.subr.bf16.mxu0 0
    %1582 = vmatpush2.bf16.msra.mxu0 0
    %1583 = vmatprep.subr.bf16.mxu0 0
    %1584 = vmatpush2.bf16.msra.mxu0 0
    %1585 = vmatprep.mubr.bf16.mxu0 0
    %1586 = vmatmul.mubr.bf16.gmra.mxu0 %v1298
    %v1587 = vpop.f32.mrf.mxu0
    %v1588 = vadd.f32 %v1343, %v1587
    %v1589 = vpop.f32.mrf.mxu0
    %v1590 = vadd.f32 %v1347, %v1589
    %v1591 = vpop.f32.mrf.mxu0
    %v1592 = vpop.f32.mrf.mxu0
    %1593 = vdwg.mxu0
    %v1594 = vmax.f32 %v1547, 0.0
    %v1595 = vmax.f32 %v1549, 0.0
    %v1596 = vmax.f32 %v1588, 0.0
    %v1597 = vmax.f32 %v1590, 0.0
    %v1598 = vmul.f32 %v1594, 0.2
    %v1599 = vmul.f32 %v1595, 0.2
    %v1600 = vmul.f32 %v1596, 0.2
    %v1601 = vmul.f32 %v1597, 0.2
    %v1602 = vmul.f32 %v902, 0.8
    %v1603 = vmul.f32 %v904, 0.8
    %v1604 = vmul.f32 %v943, 0.8
    %v1605 = vmul.f32 %v945, 0.8
    %v1606 = vadd.f32 %v1598, %v1602
    %v1607 = vadd.f32 %v1599, %v1603
    %v1608 = vadd.f32 %v1600, %v1604
    %v1609 = vadd.f32 %v1601, %v1605
    %v1610 = vld [vmem:[#allocation6] sm:$0xf]
    %v1611 = vld [vmem:[%s4] sm:$0xff]
    %v1612 = vld [vmem:[%s4 + $0x8] sm:$0xff]
    %v1613 = vld [vmem:[%s4 + $0x10] sm:$0xff]
    %v1614 = vld [vmem:[%s4 + $0x18] sm:$0xff]
    %v1615 = vld [vmem:[%s4 + $0x20] sm:$0xff]
    %v1616 = vld [vmem:[%s4 + $0x28] sm:$0xff]
    %v1617 = vld [vmem:[%s4 + $0x30] sm:$0xff]
    %v1618 = vld [vmem:[%s4 + $0x38] sm:$0xff]
    %v1619 = vld [vmem:[%s4 + $0x40] sm:$0xff]
    %v1620 = vld [vmem:[%s4 + $0x48] sm:$0xff]
    %v1621 = vld [vmem:[%s4 + $0x50] sm:$0xff]
    %v1622 = vld [vmem:[%s4 + $0x58] sm:$0xff]
    %v1623 = vld [vmem:[%s4 + $0x60] sm:$0xff]
    %v1624 = vld [vmem:[%s4 + $0x68] sm:$0xff]
    %v1625 = vld [vmem:[%s4 + $0x70] sm:$0xff]
    %v1626 = vld [vmem:[%s4 + $0x78] sm:$0xff]
    %v1643 = vunpack.c.l.b16 %v1611
    %v1644 = vunpack.c.h.b16 %v1611
    %v1645 = vunpack.c.l.b16 %v1612
    %v1646 = vunpack.c.h.b16 %v1612
    %v1647 = vunpack.c.l.b16 %v1613
    %v1648 = vunpack.c.h.b16 %v1613
    %v1649 = vunpack.c.l.b16 %v1614
    %v1650 = vunpack.c.h.b16 %v1614
    %v1651 = vunpack.c.l.b16 %v1615
    %v1652 = vunpack.c.h.b16 %v1615
    %v1653 = vunpack.c.l.b16 %v1616
    %v1654 = vunpack.c.h.b16 %v1616
    %v1655 = vunpack.c.l.b16 %v1617
    %v1656 = vunpack.c.h.b16 %v1617
    %v1657 = vunpack.c.l.b16 %v1618
    %v1658 = vunpack.c.h.b16 %v1618
    %v1659 = vunpack.c.l.b16 %v1619
    %v1660 = vunpack.c.h.b16 %v1619
    %v1661 = vunpack.c.l.b16 %v1620
    %v1662 = vunpack.c.h.b16 %v1620
    %v1663 = vunpack.c.l.b16 %v1621
    %v1664 = vunpack.c.h.b16 %v1621
    %v1665 = vunpack.c.l.b16 %v1622
    %v1666 = vunpack.c.h.b16 %v1622
    %v1667 = vunpack.c.l.b16 %v1623
    %v1668 = vunpack.c.h.b16 %v1623
    %v1669 = vunpack.c.l.b16 %v1624
    %v1670 = vunpack.c.h.b16 %v1624
    %v1671 = vunpack.c.l.b16 %v1625
    %v1672 = vunpack.c.h.b16 %v1625
    %v1673 = vunpack.c.l.b16 %v1626
    %v1674 = vunpack.c.h.b16 %v1626
    %v1675 = vpack.c.b16 %v1647, %v1643
    %v1676 = vpack.c.b16 %v1648, %v1644
    %v1677 = vpack.c.b16 %v1649, %v1645
    %v1678 = vpack.c.b16 %v1650, %v1646
    %v1679 = vpack.c.b16 %v1655, %v1651
    %v1680 = vpack.c.b16 %v1656, %v1652
    %v1681 = vpack.c.b16 %v1657, %v1653
    %v1682 = vpack.c.b16 %v1658, %v1654
    %v1683 = vpack.c.b16 %v1663, %v1659
    %v1684 = vpack.c.b16 %v1664, %v1660
    %v1685 = vpack.c.b16 %v1665, %v1661
    %v1686 = vpack.c.b16 %v1666, %v1662
    %v1687 = vpack.c.b16 %v1671, %v1667
    %v1688 = vpack.c.b16 %v1672, %v1668
    %v1689 = vpack.c.b16 %v1673, %v1669
    %v1690 = vpack.c.b16 %v1674, %v1670
    %v1708 = vsel %vm863, %v1610, 0
    %1710 = vmatprep.subr.bf16.mxu0 0
    %1711 = vmatpush1.bf16.msra.mxu0 0
    %1712 = vmatprep.subr.bf16.mxu0 0
    %1713 = vmatpush1.bf16.msra.mxu0 0
    %1714 = vmatprep.subr.bf16.mxu0 0
    %1715 = vmatpush1.bf16.msra.mxu0 0
    %1716 = vmatprep.subr.bf16.mxu0 0
    %1717 = vmatpush1.bf16.msra.mxu0 0
    %1718 = vmatprep.subr.bf16.mxu0 %v1688
    %1719 = vmatpush1.bf16.msra.mxu0 %v1687
    %1720 = vmatprep.subr.bf16.mxu0 %v1684
    %1721 = vmatpush1.bf16.msra.mxu0 %v1683
    %1722 = vmatprep.subr.bf16.mxu0 %v1680
    %1723 = vmatpush1.bf16.msra.mxu0 %v1679
    %1724 = vmatprep.subr.bf16.mxu0 %v1676
    %1725 = vmatpush1.bf16.msra.mxu0 %v1675
    %1726 = vmatprep.subr.bf16.mxu0 0
    %1727 = vmatpush2.bf16.msra.mxu0 0
    %1728 = vmatprep.subr.bf16.mxu0 0
    %1729 = vmatpush2.bf16.msra.mxu0 0
    %1730 = vmatprep.subr.bf16.mxu0 0
    %1731 = vmatpush2.bf16.msra.mxu0 0
    %1732 = vmatprep.subr.bf16.mxu0 0
    %1733 = vmatpush2.bf16.msra.mxu0 0
    %1734 = vmatprep.subr.bf16.mxu0 0
    %1735 = vmatpush2.bf16.msra.mxu0 0
    %1736 = vmatprep.subr.bf16.mxu0 0
    %1737 = vmatpush2.bf16.msra.mxu0 0
    %1738 = vmatprep.subr.bf16.mxu0 0
    %1739 = vmatpush2.bf16.msra.mxu0 0
    %1740 = vmatprep.subr.bf16.mxu0 0
    %1741 = vmatpush2.bf16.msra.mxu0 0
    %1742 = vmatprep.mubr.bf16.mxu0 0
    %1743 = vmatmul.mubr.bf16.gmra.mxu0 %v1708
    %v1744 = vpop.f32.mrf.mxu0
    %v1745 = vadd.f32 0.0, %v1744
    %v1746 = vpop.f32.mrf.mxu0
    %v1747 = vadd.f32 0.0, %v1746
    %v1748 = vpop.f32.mrf.mxu0
    %v1749 = vpop.f32.mrf.mxu0
    %1750 = vdwg.mxu0
    %1751 = vmatprep.subr.bf16.mxu0 0
    %1752 = vmatpush1.bf16.msra.mxu0 0
    %1753 = vmatprep.subr.bf16.mxu0 0
    %1754 = vmatpush1.bf16.msra.mxu0 0
    %1755 = vmatprep.subr.bf16.mxu0 0
    %1756 = vmatpush1.bf16.msra.mxu0 0
    %1757 = vmatprep.subr.bf16.mxu0 0
    %1758 = vmatpush1.bf16.msra.mxu0 0
    %1759 = vmatprep.subr.bf16.mxu0 %v1690
    %1760 = vmatpush1.bf16.msra.mxu0 %v1689
    %1761 = vmatprep.subr.bf16.mxu0 %v1686
    %1762 = vmatpush1.bf16.msra.mxu0 %v1685
    %1763 = vmatprep.subr.bf16.mxu0 %v1682
    %1764 = vmatpush1.bf16.msra.mxu0 %v1681
    %1765 = vmatprep.subr.bf16.mxu0 %v1678
    %1766 = vmatpush1.bf16.msra.mxu0 %v1677
    %1767 = vmatprep.subr.bf16.mxu0 0
    %1768 = vmatpush2.bf16.msra.mxu0 0
    %1769 = vmatprep.subr.bf16.mxu0 0
    %1770 = vmatpush2.bf16.msra.mxu0 0
    %1771 = vmatprep.subr.bf16.mxu0 0
    %1772 = vmatpush2.bf16.msra.mxu0 0
    %1773 = vmatprep.subr.bf16.mxu0 0
    %1774 = vmatpush2.bf16.msra.mxu0 0
    %1775 = vmatprep.subr.bf16.mxu0 0
    %1776 = vmatpush2.bf16.msra.mxu0 0
    %1777 = vmatprep.subr.bf16.mxu0 0
    %1778 = vmatpush2.bf16.msra.mxu0 0
    %1779 = vmatprep.subr.bf16.mxu0 0
    %1780 = vmatpush2.bf16.msra.mxu0 0
    %1781 = vmatprep.subr.bf16.mxu0 0
    %1782 = vmatpush2.bf16.msra.mxu0 0
    %1783 = vmatprep.mubr.bf16.mxu0 0
    %1784 = vmatmul.mubr.bf16.gmra.mxu0 %v1708
    %v1785 = vpop.f32.mrf.mxu0
    %v1786 = vadd.f32 0.0, %v1785
    %v1787 = vpop.f32.mrf.mxu0
    %v1788 = vadd.f32 0.0, %v1787
    %v1789 = vpop.f32.mrf.mxu0
    %v1790 = vpop.f32.mrf.mxu0
    %1791 = vdwg.mxu0
    %v1792 = vmul.f32 %v1606, %v1606
    %v1793 = vmul.f32 %v1607, %v1607
    %v1794 = vmul.f32 %v1608, %v1608
    %v1795 = vmul.f32 %v1609, %v1609
    %v1796 = vadd.f32 %v1792, %v1793
    %v1797 = vadd.f32 %v1796, %v1794
    %v1798 = vadd.f32 %v1797, %v1795
    %1799 = vadd.xlane.f32.xlu0 %v1798
    %v1800 = vpop.xlane.xlu0 %1799
    %v1801 = vadd.f32 %v1800, 1e-12
    %v1802 = vrsqrt.pop %v1801
    %v1803 = vmul.f32 %v1606, %v1802
    %v1804 = vmul.f32 %v1607, %v1802
    %v1805 = vmul.f32 %v1608, %v1802
    %v1806 = vmul.f32 %v1609, %v1802
    %v1807 = vmul.f32 %v1745, %v1745
    %v1808 = vmul.f32 %v1747, %v1747
    %v1809 = vmul.f32 %v1786, %v1786
    %v1810 = vmul.f32 %v1788, %v1788
    %v1811 = vadd.f32 %v1807, %v1808
    %v1812 = vadd.f32 %v1811, %v1809
    %v1813 = vadd.f32 %v1812, %v1810
    %1814 = vadd.xlane.f32.xlu0 %v1813
    %v1815 = vpop.xlane.xlu0 %1814
    %v1816 = vadd.f32 %v1815, 1e-12
    %v1817 = vrsqrt.pop %v1816
    %v1818 = vmul.f32 %v1745, %v1817
    %v1819 = vmul.f32 %v1747, %v1817
    %v1820 = vmul.f32 %v1786, %v1817
    %v1821 = vmul.f32 %v1788, %v1817
    %s1822 = sld [smem:[#allocation2]]
    %1823 = vmatprep.subr.mxu0 0.0
    %1824 = vmatpush1.xpose.msra.mxu0 0.0
    %1825 = vmatprep.subr.mxu0 0.0
    %1826 = vmatpush1.xpose.msra.mxu0 0.0
    %1827 = vmatprep.subr.mxu0 0.0
    %1828 = vmatpush1.xpose.msra.mxu0 0.0
    %1829 = vmatprep.subr.mxu0 0.0
    %1830 = vmatpush1.xpose.msra.mxu0 0.0
    %1831 = vmatprep.subr.mxu0 0.0
    %1832 = vmatpush1.xpose.msra.mxu0 0.0
    %1833 = vmatprep.subr.mxu0 0.0
    %1834 = vmatpush1.xpose.msra.mxu0 0.0
    %1835 = vmatprep.subr.mxu0 0.0
    %1836 = vmatpush1.xpose.msra.mxu0 0.0
    %1837 = vmatprep.subr.mxu0 0.0
    %1838 = vmatpush1.xpose.msra.mxu0 0.0
    %1839 = vmatprep.subr.mxu0 0.0
    %1840 = vmatpush1.xpose.msra.mxu0 0.0
    %1841 = vmatprep.subr.mxu0 0.0
    %1842 = vmatpush1.xpose.msra.mxu0 0.0
    %1843 = vmatprep.subr.mxu0 0.0
    %1844 = vmatpush1.xpose.msra.mxu0 0.0
    %1845 = vmatprep.subr.mxu0 0.0
    %1846 = vmatpush1.xpose.msra.mxu0 0.0
    %1847 = vmatprep.subr.mxu0 0.0
    %1848 = vmatpush1.xpose.msra.mxu0 0.0
    %1849 = vmatprep.subr.mxu0 0.0
    %1850 = vmatpush1.xpose.msra.mxu0 0.0
    %1851 = vmatprep.subr.mxu0 0.0
    %1852 = vmatpush1.xpose.msra.mxu0 0.0
    %1853 = vmatprep.subr.mxu0 %v1819
    %1854 = vmatpush1.xpose.msra.mxu0 %v1818
    %1855 = vmatprep.subr.mxu0 0.0
    %1856 = vmatpush2.xpose.msra.mxu0 0.0
    %1857 = vmatprep.subr.mxu0 0.0
    %1858 = vmatpush2.xpose.msra.mxu0 0.0
    %1859 = vmatprep.subr.mxu0 0.0
    %1860 = vmatpush2.xpose.msra.mxu0 0.0
    %1861 = vmatprep.subr.mxu0 0.0
    %1862 = vmatpush2.xpose.msra.mxu0 0.0
    %1863 = vmatprep.subr.mxu0 0.0
    %1864 = vmatpush2.xpose.msra.mxu0 0.0
    %1865 = vmatprep.subr.mxu0 0.0
    %1866 = vmatpush2.xpose.msra.mxu0 0.0
    %1867 = vmatprep.subr.mxu0 0.0
    %1868 = vmatpush2.xpose.msra.mxu0 0.0
    %1869 = vmatprep.subr.mxu0 0.0
    %1870 = vmatpush2.xpose.msra.mxu0 0.0
    %1871 = vmatprep.subr.mxu0 0.0
    %1872 = vmatpush2.xpose.msra.mxu0 0.0
    %1873 = vmatprep.subr.mxu0 0.0
    %1874 = vmatpush2.xpose.msra.mxu0 0.0
    %1875 = vmatprep.subr.mxu0 0.0
    %1876 = vmatpush2.xpose.msra.mxu0 0.0
    %1877 = vmatprep.subr.mxu0 0.0
    %1878 = vmatpush2.xpose.msra.mxu0 0.0
    %1879 = vmatprep.subr.mxu0 0.0
    %1880 = vmatpush2.xpose.msra.mxu0 0.0
    %1881 = vmatprep.subr.mxu0 0.0
    %1882 = vmatpush2.xpose.msra.mxu0 0.0
    %1883 = vmatprep.subr.mxu0 0.0
    %1884 = vmatpush2.xpose.msra.mxu0 0.0
    %1885 = vmatprep.subr.mxu0 0.0
    %1886 = vmatpush2.xpose.msra.mxu0 0.0
    %1887 = vmatprep.mubr.f32.mxu0 %v1804
    %1888 = vmatmul.mubr.f32.gmra.mxu0 %v1803
    %v1889 = vpop.f32.mrf.mxu0
    %v1890 = vadd.f32 0.0, %v1889
    %v1891 = vpop.f32.mrf.mxu0
    %1892 = vdwg.mxu0
    %1893 = vmatprep.subr.mxu0 0.0
    %1894 = vmatpush1.xpose.msra.mxu0 0.0
    %1895 = vmatprep.subr.mxu0 0.0
    %1896 = vmatpush1.xpose.msra.mxu0 0.0
    %1897 = vmatprep.subr.mxu0 0.0
    %1898 = vmatpush1.xpose.msra.mxu0 0.0
    %1899 = vmatprep.subr.mxu0 0.0
    %1900 = vmatpush1.xpose.msra.mxu0 0.0
    %1901 = vmatprep.subr.mxu0 0.0
    %1902 = vmatpush1.xpose.msra.mxu0 0.0
    %1903 = vmatprep.subr.mxu0 0.0
    %1904 = vmatpush1.xpose.msra.mxu0 0.0
    %1905 = vmatprep.subr.mxu0 0.0
    %1906 = vmatpush1.xpose.msra.mxu0 0.0
    %1907 = vmatprep.subr.mxu0 0.0
    %1908 = vmatpush1.xpose.msra.mxu0 0.0
    %1909 = vmatprep.subr.mxu0 0.0
    %1910 = vmatpush1.xpose.msra.mxu0 0.0
    %1911 = vmatprep.subr.mxu0 0.0
    %1912 = vmatpush1.xpose.msra.mxu0 0.0
    %1913 = vmatprep.subr.mxu0 0.0
    %1914 = vmatpush1.xpose.msra.mxu0 0.0
    %1915 = vmatprep.subr.mxu0 0.0
    %1916 = vmatpush1.xpose.msra.mxu0 0.0
    %1917 = vmatprep.subr.mxu0 0.0
    %1918 = vmatpush1.xpose.msra.mxu0 0.0
    %1919 = vmatprep.subr.mxu0 0.0
    %1920 = vmatpush1.xpose.msra.mxu0 0.0
    %1921 = vmatprep.subr.mxu0 0.0
    %1922 = vmatpush1.xpose.msra.mxu0 0.0
    %1923 = vmatprep.subr.mxu0 %v1821
    %1924 = vmatpush1.xpose.msra.mxu0 %v1820
    %1925 = vmatprep.subr.mxu0 0.0
    %1926 = vmatpush2.xpose.msra.mxu0 0.0
    %1927 = vmatprep.subr.mxu0 0.0
    %1928 = vmatpush2.xpose.msra.mxu0 0.0
    %1929 = vmatprep.subr.mxu0 0.0
    %1930 = vmatpush2.xpose.msra.mxu0 0.0
    %1931 = vmatprep.subr.mxu0 0.0
    %1932 = vmatpush2.xpose.msra.mxu0 0.0
    %1933 = vmatprep.subr.mxu0 0.0
    %1934 = vmatpush2.xpose.msra.mxu0 0.0
    %1935 = vmatprep.subr.mxu0 0.0
    %1936 = vmatpush2.xpose.msra.mxu0 0.0
    %1937 = vmatprep.subr.mxu0 0.0
    %1938 = vmatpush2.xpose.msra.mxu0 0.0
    %1939 = vmatprep.subr.mxu0 0.0
    %1940 = vmatpush2.xpose.msra.mxu0 0.0
    %1941 = vmatprep.subr.mxu0 0.0
    %1942 = vmatpush2.xpose.msra.mxu0 0.0
    %1943 = vmatprep.subr.mxu0 0.0
    %1944 = vmatpush2.xpose.msra.mxu0 0.0
    %1945 = vmatprep.subr.mxu0 0.0
    %1946 = vmatpush2.xpose.msra.mxu0 0.0
    %1947 = vmatprep.subr.mxu0 0.0
    %1948 = vmatpush2.xpose.msra.mxu0 0.0
    %1949 = vmatprep.subr.mxu0 0.0
    %1950 = vmatpush2.xpose.msra.mxu0 0.0
    %1951 = vmatprep.subr.mxu0 0.0
    %1952 = vmatpush2.xpose.msra.mxu0 0.0
    %1953 = vmatprep.subr.mxu0 0.0
    %1954 = vmatpush2.xpose.msra.mxu0 0.0
    %1955 = vmatprep.subr.mxu0 0.0
    %1956 = vmatpush2.xpose.msra.mxu0 0.0
    %1957 = vmatprep.mubr.f32.mxu0 %v1806
    %1958 = vmatmul.mubr.f32.gmra.mxu0 %v1805
    %v1959 = vpop.f32.mrf.mxu0
    %v1960 = vadd.f32 %v1890, %v1959
    %v1961 = vpop.f32.mrf.mxu0
    %1962 = vdwg.mxu0
    %v1963 = vstv %s1822
    %v1964 = vmul.f32 %v1963, %v1960
    %vm1965 = vcmask 64512
    %1966 = vst.msk [vmem:[#allocation8] sm:$0xff] %vm1965, %v1964
    // Predicated region
    $region50: #{tpu_custom_call.1} parent=1 // pred_check
      _
    $region51: #{tpu_custom_call.1} parent=1 // pred_check_branch
      %1968 = sbr.rel (0) target = $region53
    $region52: #{tpu_custom_call.1} parent=1 // pred_region
      %s1970 = ssub.s32 128, 128
      %1971 = vsyncadd [#allocation5], %s1970
      %s1973 = sshll.u32 [#allocation8], 4
      %s1974 = int_to_ptr.vmem [resolvable:$true] %s1973
      %1976 = dma.vmem_to_hbm [thread:$0]  %s1974, 128, %s10, [#allocation5]
    $region53: #{tpu_custom_call.1} parent=1 // pred_fallthru
      _
    // Predicated region
    $region54: #{tpu_custom_call.1} parent=1 // pred_check
      _
    $region55: #{tpu_custom_call.1} parent=1 // pred_check_branch
      %1978 = sbr.rel (0) target = $region57
    $region56: #{tpu_custom_call.1} parent=1 // pred_region
      %1979 = dma.done [#allocation5], 128
    $region57: #{tpu_custom_call.1} parent=1 // pred_fallthru
      _
    %1980 = vsyncpa [#allocation4], 1
    %1981 = vsyncpa [#allocation7], 1
    %1982 = vsyncpa [#allocation5], 1

</llo_original>
